<compile_context>
chip_gen: v7x
topology: tpu7x:2x2x1
jax: 0.10.0
libtpu: 0.0.40
codegen_flags: <defaults>
</compile_context>

<pallas_src>
import jax
import jax.numpy as jnp
from jax.experimental import pallas as pl
from jax.experimental.pallas import tpu as pltpu


def _painn_interaction_kernel(q_ref, mu_ref, wij_ref, dir_ref, idx_j_ref, idx_i_ref,
                              w1_ref, b1_ref, w2_ref, b2_ref,
                              q_out_ref, mu_out_ref, x_scr):
    A, Fp = q_ref.shape            # atoms, padded n_atom_basis
    TP = wij_ref.shape[0]          # pairs per tile
    p = pl.program_id(0)

    # ---- Phase 0 (first pair tile only): atom-wise MLP + accumulator init ----
    @pl.when(p == 0)
    def _init():
        q = q_ref[...]
        h = jnp.dot(q, w1_ref[...], preferred_element_type=jnp.float32) + b1_ref[...]
        h = h * jax.nn.sigmoid(h)                                   # SiLU
        x_scr[...] = (jnp.dot(h, w2_ref[...], preferred_element_type=jnp.float32)
                      + b2_ref[...])                                # [A, 3Fp]
        q_out_ref[...] = q
        mu_out_ref[...] = mu_ref[...]

    # ---- gather x[idx_j], mu[idx_j] for this pair tile (one-hot matmul) ------
    # TODO(synk): replace the gather one-hot with a scalar-prefetch / DMA row
    # gather for large P*A; kept f32 (not bf16) so the 1e-4 reference tolerance
    # of the validation below holds exactly.
    oh_j = (jax.lax.broadcasted_iota(jnp.int32, (TP, A), 1)
            == idx_j_ref[...]).astype(jnp.float32)                  # [TP, A]
    xj = jnp.dot(oh_j, x_scr[...], preferred_element_type=jnp.float32)    # [TP, 3Fp]
    muj = jnp.dot(oh_j, mu_ref[...], preferred_element_type=jnp.float32)  # [TP, 3Fp]
    # oh_j is dead past this point; the scatter one-hot below reuses its space.

    # ---- filter + split -------------------------------------------------------
    xw = wij_ref[...] * xj                                          # [TP, 3Fp]
    dq = xw[:, :Fp]
    dmuR = xw[:, Fp:2 * Fp]
    dmumu = xw[:, 2 * Fp:]

    # ---- scatter_add over idx_i: one-hot built pre-transposed [A, TP] --------
    oh_iT = (jax.lax.broadcasted_iota(jnp.int32, (A, TP), 0)
             == idx_i_ref[...]).astype(jnp.float32)                 # [A, TP]

    q_out_ref[...] += jnp.dot(oh_iT, dq, preferred_element_type=jnp.float32)

    dir_e = dir_ref[...]                                            # [TP, 3Fp] lane-dense
    for c in range(3):                                              # spatial components
        lo, hi = c * Fp, (c + 1) * Fp
        dmu_c = dmuR * dir_e[:, lo:hi] + dmumu * muj[:, lo:hi]      # [TP, Fp]
        mu_out_ref[:, lo:hi] += jnp.dot(oh_iT, dmu_c,
                                        preferred_element_type=jnp.float32)


def painn_interaction(q, mu, Wij, dir_ij, idx_i, idx_j, n_atoms, params, *, tile_p=512):
    """q: [A,1,F], mu: [A,3,F], Wij: [P,1,3F], dir_ij: [P,3], idx_*: [P] int32.

    params = (W1[F,F], b1[1,F], W2[F,3F], b2[1,3F]) of interatomic_context_net.
    """
    W1, b1, W2, b2 = params
    A, _, F = q.shape
    P = idx_i.shape[0]
    assert n_atoms == A

    f32 = jnp.float32
    Fp = ((F + 127) // 128) * 128                   # lane-dense feature width
    TP = max(128, ((tile_p + 127) // 128) * 128)    # pair tile, multiple of 128 lanes
    P_pad = ((max(P, 1) + TP - 1) // TP) * TP
    n_tiles = P_pad // TP

    def pad_last(x, width):
        x = x.astype(f32)
        return jnp.pad(x, [(0, 0)] * (x.ndim - 1) + [(0, width - x.shape[-1])])

    def pad_chunks(x3):          # [..., 3, F] -> [..., 3*Fp] (component-major)
        x3 = pad_last(x3, Fp)
        return x3.reshape(*x3.shape[:-2], 3 * Fp)

    # --- lane-dense, zero-padded operands --------------------------------------
    q2 = pad_last(q.reshape(A, F), Fp)                              # [A, Fp]
    mu2 = pad_chunks(mu)                                            # [A, 3Fp]
    wij2 = pad_chunks(Wij.reshape(P, 3, F))                         # [P, 3Fp]
    dir2 = jnp.repeat(dir_ij.astype(f32), Fp, axis=-1)              # [P, 3Fp], c-major
    W1p = jnp.zeros((Fp, Fp), f32).at[:F, :F].set(W1.astype(f32))
    b1p = pad_last(b1.reshape(1, F), Fp)
    W2p = jnp.zeros((Fp, 3, Fp), f32).at[:F, :, :F].set(
        W2.astype(f32).reshape(F, 3, F)).reshape(Fp, 3 * Fp)
    b2p = pad_chunks(b2.reshape(1, 3, F))

    # --- pad the pair axis; out-of-range index (== A) makes padded rows inert --
    pp = P_pad - P
    wij2 = jnp.pad(wij2, ((0, pp), (0, 0)))
    dir2 = jnp.pad(dir2, ((0, pp), (0, 0)))
    idx_j_col = jnp.pad(idx_j.astype(jnp.int32), (0, pp),
                        constant_values=A).reshape(P_pad, 1)         # sublane layout
    idx_i_row = jnp.pad(idx_i.astype(jnp.int32), (0, pp),
                        constant_values=A).reshape(1, P_pad)         # lane layout

    resident = lambda shape: pl.BlockSpec(shape, lambda p: (0, 0))

    # TODO(synk): for v7x megacore add a leading "parallel" axis over atom tiles
    # so both TensorCores share the scatter; single-axis kept here for clarity.
    q_out, mu_out = pl.pallas_call(
        _painn_interaction_kernel,
        out_shape=(jax.ShapeDtypeStruct((A, Fp), f32),
                   jax.ShapeDtypeStruct((A, 3 * Fp), f32)),
        grid=(n_tiles,),
        in_specs=[resident((A, Fp)),                               # q (resident)
                  resident((A, 3 * Fp)),                           # mu (resident)
                  pl.BlockSpec((TP, 3 * Fp), lambda p: (p, 0)),    # Wij pair tile
                  pl.BlockSpec((TP, 3 * Fp), lambda p: (p, 0)),    # dir pair tile
                  pl.BlockSpec((TP, 1), lambda p: (p, 0)),         # idx_j
                  pl.BlockSpec((1, TP), lambda p: (0, p)),         # idx_i
                  resident((Fp, Fp)),                              # W1
                  resident((1, Fp)),                               # b1
                  resident((Fp, 3 * Fp)),                          # W2
                  resident((1, 3 * Fp))],                          # b2
        out_specs=(resident((A, Fp)),                              # q accumulator
                   resident((A, 3 * Fp))),                         # mu accumulator
        scratch_shapes=[pltpu.VMEM((A, 3 * Fp), f32)],             # context x, persists
        compiler_params=pltpu.CompilerParams(
            dimension_semantics=("arbitrary",),                    # reduction over pair tiles
            vmem_limit_bytes=48 * 1024 * 1024),                    # v7x-safe (64 MiB phys)
    )(q2, mu2, wij2, dir2, idx_j_col, idx_i_row, W1p, b1p, W2p, b2p)

    return (q_out[:, :F].reshape(A, 1, F),
            mu_out.reshape(A, 3, Fp)[:, :, :F])


if __name__ == "__main__":
    A, P, F = 8, 160, 32   # n_atoms, n_pairs, n_atom_basis (small demo shapes)

    key = jax.random.PRNGKey(0)
    ks = jax.random.split(key, 10)
    q = jax.random.normal(ks[0], (A, 1, F), jnp.float32)
    mu = jax.random.normal(ks[1], (A, 3, F), jnp.float32)
    Wij = jax.random.normal(ks[2], (P, 1, 3 * F), jnp.float32)
    dir_ij = jax.random.normal(ks[3], (P, 3), jnp.float32)
    dir_ij = dir_ij / jnp.linalg.norm(dir_ij, axis=-1, keepdims=True)
    idx_i = jax.random.randint(ks[4], (P,), 0, A, jnp.int32)
    idx_j = jax.random.randint(ks[5], (P,), 0, A, jnp.int32)

    # Deterministic parameters for interatomic_context_net (Dense(F,F,silu), Dense(F,3F)).
    W1 = jax.random.normal(ks[6], (F, F), jnp.float32) / jnp.sqrt(F)
    b1 = 0.1 * jax.random.normal(ks[7], (1, F), jnp.float32)
    W2 = jax.random.normal(ks[8], (F, 3 * F), jnp.float32) / jnp.sqrt(F)
    b2 = 0.1 * jax.random.normal(ks[9], (1, 3 * F), jnp.float32)

    # tile_p=128 so the demo exercises multiple pair tiles + accumulation path.
    q_out, mu_out = painn_interaction(q, mu, Wij, dir_ij, idx_i, idx_j, A,
                                      (W1, b1, W2, b2), tile_p=128)
    jax.block_until_ready((q_out, mu_out))

    # Pure-JAX reference (same semantics as the PyTorch forward).
    x_ref = jax.nn.silu(q.reshape(A, F) @ W1 + b1) @ W2 + b2            # [A, 3F]
    xj_ref = x_ref[idx_j][:, None, :]                                   # [P, 1, 3F]
    muj_ref = mu[idx_j]                                                 # [P, 3, F]
    xw_ref = Wij * xj_ref                                               # [P, 1, 3F]
    dq_r, dmuR_r, dmumu_r = jnp.split(xw_ref, 3, axis=-1)
    dq_s = jax.ops.segment_sum(dq_r, idx_i, num_segments=A)             # [A, 1, F]
    dmu_r = dmuR_r * dir_ij[..., None] + dmumu_r * muj_ref              # [P, 3, F]
    dmu_s = jax.ops.segment_sum(dmu_r, idx_i, num_segments=A)           # [A, 3, F]
    q_expect = q + dq_s
    mu_expect = mu + dmu_s

    assert jnp.allclose(q_out, q_expect, atol=1e-4, rtol=1e-4)
    assert jnp.allclose(mu_out, mu_expect, atol=1e-4, rtol=1e-4)
    print("KERNEL_OK")
</pallas_src>

<mosaic_0001>
module attributes {stable_mosaic.version = 11 : i64} {
  func.func @_painn_interaction_kernel(%arg0: i32, %arg1: memref<8x128xf32, #tpu.memory_space<vmem>>, %arg2: memref<8x384xf32, #tpu.memory_space<vmem>>, %arg3: memref<128x384xf32, #tpu.memory_space<vmem>>, %arg4: memref<128x384xf32, #tpu.memory_space<vmem>>, %arg5: memref<128x1xi32, #tpu.memory_space<vmem>>, %arg6: memref<1x128xi32, #tpu.memory_space<vmem>>, %arg7: memref<128x128xf32, #tpu.memory_space<vmem>>, %arg8: memref<1x128xf32, #tpu.memory_space<vmem>>, %arg9: memref<128x384xf32, #tpu.memory_space<vmem>>, %arg10: memref<1x384xf32, #tpu.memory_space<vmem>>, %arg11: memref<8x128xf32, #tpu.memory_space<vmem>>, %arg12: memref<8x384xf32, #tpu.memory_space<vmem>>, %arg13: memref<8x384xf32, #tpu.memory_space<vmem>>) attributes {dimension_semantics = [#tpu.dimension_semantics<arbitrary>], iteration_bounds = array<i64: 2>, scalar_prefetch = 0 : i64, scratch_operands = 1 : i64, tpu.core_type = #tpu.core_type<tc>, window_params = [{pipeline_mode = #tpu.pipeline_mode<synchronous>, transform_indices = @transform_0, window_bounds = array<i64: 8, 128>}, {pipeline_mode = #tpu.pipeline_mode<synchronous>, transform_indices = @transform_1, window_bounds = array<i64: 8, 384>}, {transform_indices = @transform_2, window_bounds = array<i64: 128, 384>}, {transform_indices = @transform_3, window_bounds = array<i64: 128, 384>}, {transform_indices = @transform_4, window_bounds = array<i64: 128, 1>}, {transform_indices = @transform_5, window_bounds = array<i64: 1, 128>}, {pipeline_mode = #tpu.pipeline_mode<synchronous>, transform_indices = @transform_6, window_bounds = array<i64: 128, 128>}, {pipeline_mode = #tpu.pipeline_mode<synchronous>, transform_indices = @transform_7, window_bounds = array<i64: 1, 128>}, {pipeline_mode = #tpu.pipeline_mode<synchronous>, transform_indices = @transform_8, window_bounds = array<i64: 128, 384>}, {pipeline_mode = #tpu.pipeline_mode<synchronous>, transform_indices = @transform_9, window_bounds = array<i64: 1, 384>}, {pipeline_mode = #tpu.pipeline_mode<synchronous>, transform_indices = @transform_10, window_bounds = array<i64: 8, 128>}, {pipeline_mode = #tpu.pipeline_mode<synchronous>, transform_indices = @transform_11, window_bounds = array<i64: 8, 384>}]} {
    %c0_i32 = arith.constant 0 : i32
    %0 = arith.cmpi eq, %arg0, %c0_i32 : i32
    %1 = arith.extui %0 : i1 to i32
    %c0_i32_0 = arith.constant 0 : i32
    %2 = arith.cmpi ne, %1, %c0_i32_0 : i32
    scf.if %2 {
      %c0_31 = arith.constant 0 : index
      %c0_32 = arith.constant 0 : index
      %56 = vector.load %arg1[%c0_31, %c0_32] : memref<8x128xf32, #tpu.memory_space<vmem>>, vector<8x128xf32>
      %c0_33 = arith.constant 0 : index
      %c0_34 = arith.constant 0 : index
      %57 = vector.load %arg7[%c0_33, %c0_34] : memref<128x128xf32, #tpu.memory_space<vmem>>, vector<128x128xf32>
      %cst_35 = arith.constant dense<0.000000e+00> : vector<8x128xf32>
      %58 = tpu.matmul %56, %57, %cst_35 {dimension_numbers = #tpu.dot_dimension_numbers<[1], [0], [0], [1], [0, 0, 1, 1], [], []>} : vector<8x128xf32>, vector<128x128xf32>, vector<8x128xf32> -> vector<8x128xf32>
      %c0_36 = arith.constant 0 : index
      %c0_37 = arith.constant 0 : index
      %59 = vector.load %arg8[%c0_36, %c0_37] : memref<1x128xf32, #tpu.memory_space<vmem>>, vector<1x128xf32>
      %60 = vector.broadcast %59 : vector<1x128xf32> to vector<8x128xf32>
      %61 = arith.addf %58, %60 : vector<8x128xf32>
      %62 = arith.negf %61 : vector<8x128xf32>
      %63 = math.exp %62 : vector<8x128xf32>
      %cst_38 = arith.constant 1.000000e+00 : f32
      %64 = vector.broadcast %cst_38 : f32 to vector<8x128xf32>
      %65 = arith.addf %64, %63 : vector<8x128xf32>
      %66 = arith.divf %64, %65 : vector<8x128xf32>
      %67 = arith.mulf %61, %66 : vector<8x128xf32>
      %c0_39 = arith.constant 0 : index
      %c0_40 = arith.constant 0 : index
      %68 = vector.load %arg9[%c0_39, %c0_40] : memref<128x384xf32, #tpu.memory_space<vmem>>, vector<128x384xf32>
      %cst_41 = arith.constant dense<0.000000e+00> : vector<8x384xf32>
      %69 = tpu.matmul %67, %68, %cst_41 {dimension_numbers = #tpu.dot_dimension_numbers<[1], [0], [0], [1], [0, 0, 1, 1], [], []>} : vector<8x128xf32>, vector<128x384xf32>, vector<8x384xf32> -> vector<8x384xf32>
      %c0_42 = arith.constant 0 : index
      %c0_43 = arith.constant 0 : index
      %70 = vector.load %arg10[%c0_42, %c0_43] : memref<1x384xf32, #tpu.memory_space<vmem>>, vector<1x384xf32>
      %71 = vector.broadcast %70 : vector<1x384xf32> to vector<8x384xf32>
      %72 = arith.addf %69, %71 : vector<8x384xf32>
      %c0_44 = arith.constant 0 : index
      %c0_45 = arith.constant 0 : index
      %73 = vector.load %arg13[%c0_44, %c0_45] : memref<8x384xf32, #tpu.memory_space<vmem>>, vector<8x384xf32>
      tpu.vector_store %arg13[%c0_44, %c0_45], %72 {strides = array<i32>} : memref<8x384xf32, #tpu.memory_space<vmem>>, vector<8x384xf32>,
      %c0_46 = arith.constant 0 : index
      %c0_47 = arith.constant 0 : index
      %74 = vector.load %arg11[%c0_46, %c0_47] : memref<8x128xf32, #tpu.memory_space<vmem>>, vector<8x128xf32>
      tpu.vector_store %arg11[%c0_46, %c0_47], %56 {strides = array<i32>} : memref<8x128xf32, #tpu.memory_space<vmem>>, vector<8x128xf32>,
      %c0_48 = arith.constant 0 : index
      %c0_49 = arith.constant 0 : index
      %75 = vector.load %arg2[%c0_48, %c0_49] : memref<8x384xf32, #tpu.memory_space<vmem>>, vector<8x384xf32>
      %c0_50 = arith.constant 0 : index
      %c0_51 = arith.constant 0 : index
      %76 = vector.load %arg12[%c0_50, %c0_51] : memref<8x384xf32, #tpu.memory_space<vmem>>, vector<8x384xf32>
      tpu.vector_store %arg12[%c0_50, %c0_51], %75 {strides = array<i32>} : memref<8x384xf32, #tpu.memory_space<vmem>>, vector<8x384xf32>,
    } else {
    }
    %3 = tpu.iota {dimensions = array<i32: 1>} : vector<128x8xi32>
    %c0 = arith.constant 0 : index
    %c0_1 = arith.constant 0 : index
    %4 = vector.load %arg5[%c0, %c0_1] : memref<128x1xi32, #tpu.memory_space<vmem>>, vector<128x1xi32>
    %5 = vector.broadcast %4 : vector<128x1xi32> to vector<128x8xi32>
    %6 = arith.cmpi eq, %3, %5 : vector<128x8xi32>
    %7 = arith.extui %6 : vector<128x8xi1> to vector<128x8xi32>
    %8 = arith.sitofp %7 : vector<128x8xi32> to vector<128x8xf32>
    %c0_2 = arith.constant 0 : index
    %c0_3 = arith.constant 0 : index
    %9 = vector.load %arg13[%c0_2, %c0_3] : memref<8x384xf32, #tpu.memory_space<vmem>>, vector<8x384xf32>
    %cst = arith.constant dense<0.000000e+00> : vector<128x384xf32>
    %10 = tpu.matmul %8, %9, %cst {dimension_numbers = #tpu.dot_dimension_numbers<[1], [0], [0], [1], [0, 0, 1, 1], [], []>} : vector<128x8xf32>, vector<8x384xf32>, vector<128x384xf32> -> vector<128x384xf32>
    %c0_4 = arith.constant 0 : index
    %c0_5 = arith.constant 0 : index
    %11 = vector.load %arg2[%c0_4, %c0_5] : memref<8x384xf32, #tpu.memory_space<vmem>>, vector<8x384xf32>
    %cst_6 = arith.constant dense<0.000000e+00> : vector<128x384xf32>
    %12 = tpu.matmul %8, %11, %cst_6 {dimension_numbers = #tpu.dot_dimension_numbers<[1], [0], [0], [1], [0, 0, 1, 1], [], []>} : vector<128x8xf32>, vector<8x384xf32>, vector<128x384xf32> -> vector<128x384xf32>
    %c0_7 = arith.constant 0 : index
    %c0_8 = arith.constant 0 : index
    %13 = vector.load %arg3[%c0_7, %c0_8] : memref<128x384xf32, #tpu.memory_space<vmem>>, vector<128x384xf32>
    %14 = arith.mulf %13, %10 : vector<128x384xf32>
    %15 = vector.extract_strided_slice %14 {offsets = [0, 0], sizes = [128, 128], strides = [1, 1]} : vector<128x384xf32> to vector<128x128xf32>
    %16 = vector.extract_strided_slice %14 {offsets = [0, 128], sizes = [128, 128], strides = [1, 1]} : vector<128x384xf32> to vector<128x128xf32>
    %17 = vector.extract_strided_slice %14 {offsets = [0, 256], sizes = [128, 128], strides = [1, 1]} : vector<128x384xf32> to vector<128x128xf32>
    %18 = tpu.iota {dimensions = array<i32: 0>} : vector<8x128xi32>
    %c0_9 = arith.constant 0 : index
    %c0_10 = arith.constant 0 : index
    %19 = vector.load %arg6[%c0_9, %c0_10] : memref<1x128xi32, #tpu.memory_space<vmem>>, vector<1x128xi32>
    %20 = vector.broadcast %19 : vector<1x128xi32> to vector<8x128xi32>
    %21 = arith.cmpi eq, %18, %20 : vector<8x128xi32>
    %22 = arith.extui %21 : vector<8x128xi1> to vector<8x128xi32>
    %23 = arith.sitofp %22 : vector<8x128xi32> to vector<8x128xf32>
    %c0_11 = arith.constant 0 : index
    %c0_12 = arith.constant 0 : index
    %24 = vector.load %arg11[%c0_11, %c0_12] : memref<8x128xf32, #tpu.memory_space<vmem>>, vector<8x128xf32>
    %cst_13 = arith.constant dense<0.000000e+00> : vector<8x128xf32>
    %25 = tpu.matmul %23, %15, %cst_13 {dimension_numbers = #tpu.dot_dimension_numbers<[1], [0], [0], [1], [0, 0, 1, 1], [], []>} : vector<8x128xf32>, vector<128x128xf32>, vector<8x128xf32> -> vector<8x128xf32>
    %26 = arith.addf %24, %25 : vector<8x128xf32>
    %c0_14 = arith.constant 0 : index
    %c0_15 = arith.constant 0 : index
    %27 = vector.load %arg11[%c0_14, %c0_15] : memref<8x128xf32, #tpu.memory_space<vmem>>, vector<8x128xf32>
    tpu.vector_store %arg11[%c0_14, %c0_15], %26 {strides = array<i32>} : memref<8x128xf32, #tpu.memory_space<vmem>>, vector<8x128xf32>,
    %c0_16 = arith.constant 0 : index
    %c0_17 = arith.constant 0 : index
    %28 = vector.load %arg4[%c0_16, %c0_17] : memref<128x384xf32, #tpu.memory_space<vmem>>, vector<128x384xf32>
    %29 = vector.extract_strided_slice %28 {offsets = [0, 0], sizes = [128, 128], strides = [1, 1]} : vector<128x384xf32> to vector<128x128xf32>
    %30 = arith.mulf %16, %29 : vector<128x128xf32>
    %31 = vector.extract_strided_slice %12 {offsets = [0, 0], sizes = [128, 128], strides = [1, 1]} : vector<128x384xf32> to vector<128x128xf32>
    %32 = arith.mulf %17, %31 : vector<128x128xf32>
    %33 = arith.addf %30, %32 : vector<128x128xf32>
    %c0_18 = arith.constant 0 : index
    %c0_19 = arith.constant 0 : index
    %34 = vector.load %arg12[%c0_18, %c0_19] : memref<8x384xf32, #tpu.memory_space<vmem>>, vector<8x128xf32>
    %cst_20 = arith.constant dense<0.000000e+00> : vector<8x128xf32>
    %35 = tpu.matmul %23, %33, %cst_20 {dimension_numbers = #tpu.dot_dimension_numbers<[1], [0], [0], [1], [0, 0, 1, 1], [], []>} : vector<8x128xf32>, vector<128x128xf32>, vector<8x128xf32> -> vector<8x128xf32>
    %36 = arith.addf %34, %35 : vector<8x128xf32>
    %c0_21 = arith.constant 0 : index
    %c0_22 = arith.constant 0 : index
    %37 = vector.load %arg12[%c0_21, %c0_22] : memref<8x384xf32, #tpu.memory_space<vmem>>, vector<8x128xf32>
    tpu.vector_store %arg12[%c0_21, %c0_22], %36 {strides = array<i32>} : memref<8x384xf32, #tpu.memory_space<vmem>>, vector<8x128xf32>,
    %38 = vector.extract_strided_slice %28 {offsets = [0, 128], sizes = [128, 128], strides = [1, 1]} : vector<128x384xf32> to vector<128x128xf32>
    %39 = arith.mulf %16, %38 : vector<128x128xf32>
    %40 = vector.extract_strided_slice %12 {offsets = [0, 128], sizes = [128, 128], strides = [1, 1]} : vector<128x384xf32> to vector<128x128xf32>
    %41 = arith.mulf %17, %40 : vector<128x128xf32>
    %42 = arith.addf %39, %41 : vector<128x128xf32>
    %c0_23 = arith.constant 0 : index
    %c128 = arith.constant 128 : index
    %43 = vector.load %arg12[%c0_23, %c128] : memref<8x384xf32, #tpu.memory_space<vmem>>, vector<8x128xf32>
    %cst_24 = arith.constant dense<0.000000e+00> : vector<8x128xf32>
    %44 = tpu.matmul %23, %42, %cst_24 {dimension_numbers = #tpu.dot_dimension_numbers<[1], [0], [0], [1], [0, 0, 1, 1], [], []>} : vector<8x128xf32>, vector<128x128xf32>, vector<8x128xf32> -> vector<8x128xf32>
    %45 = arith.addf %43, %44 : vector<8x128xf32>
    %c0_25 = arith.constant 0 : index
    %c128_26 = arith.constant 128 : index
    %46 = vector.load %arg12[%c0_25, %c128_26] : memref<8x384xf32, #tpu.memory_space<vmem>>, vector<8x128xf32>
    tpu.vector_store %arg12[%c0_25, %c128_26], %45 {strides = array<i32>} : memref<8x384xf32, #tpu.memory_space<vmem>>, vector<8x128xf32>,
    %47 = vector.extract_strided_slice %28 {offsets = [0, 256], sizes = [128, 128], strides = [1, 1]} : vector<128x384xf32> to vector<128x128xf32>
    %48 = arith.mulf %16, %47 : vector<128x128xf32>
    %49 = vector.extract_strided_slice %12 {offsets = [0, 256], sizes = [128, 128], strides = [1, 1]} : vector<128x384xf32> to vector<128x128xf32>
    %50 = arith.mulf %17, %49 : vector<128x128xf32>
    %51 = arith.addf %48, %50 : vector<128x128xf32>
    %c0_27 = arith.constant 0 : index
    %c256 = arith.constant 256 : index
    %52 = vector.load %arg12[%c0_27, %c256] : memref<8x384xf32, #tpu.memory_space<vmem>>, vector<8x128xf32>
    %cst_28 = arith.constant dense<0.000000e+00> : vector<8x128xf32>
    %53 = tpu.matmul %23, %51, %cst_28 {dimension_numbers = #tpu.dot_dimension_numbers<[1], [0], [0], [1], [0, 0, 1, 1], [], []>} : vector<8x128xf32>, vector<128x128xf32>, vector<8x128xf32> -> vector<8x128xf32>
    %54 = arith.addf %52, %53 : vector<8x128xf32>
    %c0_29 = arith.constant 0 : index
    %c256_30 = arith.constant 256 : index
    %55 = vector.load %arg12[%c0_29, %c256_30] : memref<8x384xf32, #tpu.memory_space<vmem>>, vector<8x128xf32>
    tpu.vector_store %arg12[%c0_29, %c256_30], %54 {strides = array<i32>} : memref<8x384xf32, #tpu.memory_space<vmem>>, vector<8x128xf32>,
    return
  }
  func.func @transform_0(%arg0: i32) -> (i32, i32) {
    %c0_i32 = arith.constant 0 : i32
    %c0_i32_0 = arith.constant 0 : i32
    %c0_i32_1 = arith.constant 0 : i32
    return %c0_i32, %c0_i32_0 : i32, i32
  }
  func.func @transform_1(%arg0: i32) -> (i32, i32) {
    %c0_i32 = arith.constant 0 : i32
    %c0_i32_0 = arith.constant 0 : i32
    %c0_i32_1 = arith.constant 0 : i32
    return %c0_i32, %c0_i32_0 : i32, i32
  }
  func.func @transform_2(%arg0: i32) -> (i32, i32) {
    %c0_i32 = arith.constant 0 : i32
    %c0_i32_0 = arith.constant 0 : i32
    return %arg0, %c0_i32 : i32, i32
  }
  func.func @transform_3(%arg0: i32) -> (i32, i32) {
    %c0_i32 = arith.constant 0 : i32
    %c0_i32_0 = arith.constant 0 : i32
    return %arg0, %c0_i32 : i32, i32
  }
  func.func @transform_4(%arg0: i32) -> (i32, i32) {
    %c0_i32 = arith.constant 0 : i32
    %c0_i32_0 = arith.constant 0 : i32
    return %arg0, %c0_i32 : i32, i32
  }
  func.func @transform_5(%arg0: i32) -> (i32, i32) {
    %c0_i32 = arith.constant 0 : i32
    %c0_i32_0 = arith.constant 0 : i32
    return %c0_i32, %arg0 : i32, i32
  }
  func.func @transform_6(%arg0: i32) -> (i32, i32) {
    %c0_i32 = arith.constant 0 : i32
    %c0_i32_0 = arith.constant 0 : i32
    %c0_i32_1 = arith.constant 0 : i32
    return %c0_i32, %c0_i32_0 : i32, i32
  }
  func.func @transform_7(%arg0: i32) -> (i32, i32) {
    %c0_i32 = arith.constant 0 : i32
    %c0_i32_0 = arith.constant 0 : i32
    %c0_i32_1 = arith.constant 0 : i32
    return %c0_i32, %c0_i32_0 : i32, i32
  }
  func.func @transform_8(%arg0: i32) -> (i32, i32) {
    %c0_i32 = arith.constant 0 : i32
    %c0_i32_0 = arith.constant 0 : i32
    %c0_i32_1 = arith.constant 0 : i32
    return %c0_i32, %c0_i32_0 : i32, i32
  }
  func.func @transform_9(%arg0: i32) -> (i32, i32) {
    %c0_i32 = arith.constant 0 : i32
    %c0_i32_0 = arith.constant 0 : i32
    %c0_i32_1 = arith.constant 0 : i32
    return %c0_i32, %c0_i32_0 : i32, i32
  }
  func.func @transform_10(%arg0: i32) -> (i32, i32) {
    %c0_i32 = arith.constant 0 : i32
    %c0_i32_0 = arith.constant 0 : i32
    %c0_i32_1 = arith.constant 0 : i32
    return %c0_i32, %c0_i32_0 : i32, i32
  }
  func.func @transform_11(%arg0: i32) -> (i32, i32) {
    %c0_i32 = arith.constant 0 : i32
    %c0_i32_0 = arith.constant 0 : i32
    %c0_i32_1 = arith.constant 0 : i32
    return %c0_i32, %c0_i32_0 : i32, i32
  }
}

</mosaic_0001>

<llo_original>
// kernel: tpu_custom_call.1
$region0: #{tpu_custom_call.1}
  #allocation0 [shape = 'u32[]', space=smem, size = 0x4, offset = 0x4, fixed_abs, tag = 'smem constant byte address 0x4 - core index']
  #allocation1 [shape = 'u32[144,128]{1,0:T(1,128)}', space=vmem, size = 0x12000, scoped, tag = 'internal scratch']
  #allocation2 [shape = 'f32[8,384]{1,0:T(8,128)}', space=vmem, size = 0x3000, scoped, tag = 'scratch operand']
  %s0 = inlined_call_operand.vmem [shape: f32[8,128], index: 0, kind: input, shape index: {}]
  %s1 = inlined_call_operand.vmem [shape: f32[8,384], index: 1, kind: input, shape index: {}]
  %s2 = inlined_call_operand.hbm [shape: f32[256,384], index: 2, kind: input, shape index: {}]
  %s3 = inlined_call_operand.hbm [shape: f32[256,384], index: 3, kind: input, shape index: {}]
  %s4 = inlined_call_operand.vmem [shape: s32[256,1], index: 4, kind: input, shape index: {}]
  %s5 = inlined_call_operand.vmem [shape: s32[1,256], index: 5, kind: input, shape index: {}]
  %s6 = inlined_call_operand.vmem [shape: f32[128,128], index: 6, kind: input, shape index: {}]
  %s7 = inlined_call_operand.vmem [shape: f32[1,128], index: 7, kind: input, shape index: {}]
  %s8 = inlined_call_operand.hbm [shape: f32[128,384], index: 8, kind: input, shape index: {}]
  %s9 = inlined_call_operand.vmem [shape: f32[1,384], index: 9, kind: input, shape index: {}]
  %s10 = inlined_call_operand.hbm [shape: f32[8,128], index: 10, kind: output, shape index: {0}]
  %s11 = inlined_call_operand.hbm [shape: f32[8,384], index: 11, kind: output, shape index: {1}]
  %12 = xla_tuple %s10, %s11
  %s13 = sld [smem:[#allocation0]]
  $region97: #{tpu_custom_call.1} parent=0
    _
  %s15 = ssub.s32 1, %s13
  %s16 = scalar_select 0, %s15, %s13
  $region1: #{tpu_custom_call.1} parent=0
    #allocation3 [shape = 'u8[393216]{0}', space=vmem, size = 0x60000, scoped, tag = 'input window, operand 2']
    #allocation4 [shape = 's32[2]{0}', space=sflag, size = 0x8, scoped, tag = 'scoped memory for tpu_custom_call.1']
    #allocation5 [shape = 's32[2]{0}', space=sflag, size = 0x8, scoped, tag = 'scoped memory for tpu_custom_call.1']
    #allocation6 [shape = 'u8[393216]{0}', space=vmem, size = 0x60000, scoped, tag = 'input window, operand 3']
    #allocation7 [shape = 's32[2]{0}', space=sflag, size = 0x8, scoped, tag = 'scoped memory for tpu_custom_call.1']
    #allocation8 [shape = 'u8[196608]{0}', space=vmem, size = 0x30000, scoped, tag = 'input window, operand 8, single buffered']
    #allocation9 [shape = 'u8[4096]{0}', space=vmem, size = 0x1000, scoped, tag = 'output window, operand 0, single buffered']
    #allocation10 [shape = 'u8[12288]{0}', space=vmem, size = 0x3000, scoped, tag = 'output window, operand 1, single buffered']
    #allocation11 [shape = 's32[1]{0}', space=sflag, size = 0x4, scoped, tag = 'scoped memory for tpu_custom_call.1']
    %17 = vsyncpa [#allocation4], 0
    %s18 = scalar_lea.sflag [#allocation4], 1
    %19 = vsyncpa %s18, 0
    %20 = vsyncpa [#allocation7], 0
    %s21 = scalar_lea.sflag [#allocation7], 1
    %22 = vsyncpa %s21, 0
    %23 = vsyncpa [#allocation5], 0
    %24 = vsyncpa [#allocation11], 0
    loop: start=0, step=1, limit=4
    $region2: #{tpu_custom_call.1} parent=1 // loop_pre_header
      _
    $region3: #{tpu_custom_call.1} parent=1 // loop_header
      %s26 = sphi 0, %s30
      %p27 = scmp.ge.s32.totalorder %s26, 4
      %s34 = sphi 0, %s34
      %s36 = sphi 0, %s34
      %s37 = sphi 0, %s36
      %s51 = sphi 0, %s37
      %s55 = sphi 0, %s55
      %s57 = sphi 0, %s55
      %s58 = sphi 0, %s57
      %s72 = sphi 0, %s58
      %s78 = sphi 0, %s80
      %s81 = sphi 0, %s78
      %s82 = sphi 0, %s81
      %s98 = sphi 0, %s82
      %s104 = sphi 0, %s106
      %s107 = sphi 0, %s104
      %s108 = sphi 0, %s107
      %s124 = sphi 0, %s108
      %s130 = sphi 0, %s132
      %s133 = sphi 0, %s130
      %s134 = sphi 0, %s133
      %s150 = sphi 0, %s134
      %s156 = sphi 0, %s158
      %s159 = sphi 0, %s156
      %s160 = sphi 0, %s159
      %s176 = sphi 0, %s160
      %s180 = sphi 0, %s180
      %s182 = sphi 0, %s180
      %s183 = sphi 0, %s182
      %s197 = sphi 0, %s183
      %s201 = sphi 0, %s201
      %s203 = sphi 0, %s201
      %s204 = sphi 0, %s203
      %s218 = sphi 0, %s204
      %s222 = sphi 0, %s222
      %s224 = sphi 0, %s222
      %s225 = sphi 0, %s224
      %s239 = sphi 0, %s225
      %s243 = sphi 0, %s243
      %s245 = sphi 0, %s243
      %s246 = sphi 0, %s245
      %s260 = sphi 0, %s246
      %s264 = sphi 0, %s264
      %s266 = sphi 0, %s264
      %s267 = sphi 0, %s266
      %s281 = sphi 0, %s267
      %s285 = sphi 0, %s285
      %s287 = sphi 0, %s285
      %s288 = sphi 0, %s287
      %s302 = sphi 0, %s288
    $region4: #{tpu_custom_call.1} parent=1 // loop_header_branch
      %29 = sbr.rel (%p27) target = $region8
    $region5: #{tpu_custom_call.1} parent=1 // loop_body
      %s31 = ssub.s32 %s26, 1
      %s32 = ssub.s32 %s26, 2
      %s33 = sadd.s32 %s26, 1
      %s35 = sadd.s32 %s34, 1
      %p38 = scmp.eq.s32.totalorder %s26, 1
      %p39 = scmp.ne.s32.totalorder %s34, %s36
      %p40 = scmp.eq.s32.totalorder %s26, 0
      %p41 = por %p39, %p40
      %p42 = scmp.ne.s32.totalorder %s34, %s36
      %p43 = scmp.eq.s32.totalorder %s31, 1
      %p44 = por %p42, %p43
      %p45 = scmp.ne.s32.totalorder %s36, %s37
      %p46 = scmp.eq.s32.totalorder %s31, 0
      %p47 = por %p45, %p46
      %p48 = scmp.ne.s32.totalorder %s36, %s37
      %p49 = scmp.eq.s32.totalorder %s32, 1
      %p50 = por %p48, %p49
      %p52 = scmp.ne.s32.totalorder %s37, %s51
      %p53 = scmp.eq.s32.totalorder %s32, 0
      %p54 = por %p52, %p53
      %s56 = sadd.s32 %s55, 1
      %p59 = scmp.eq.s32.totalorder %s26, 1
      %p60 = scmp.ne.s32.totalorder %s55, %s57
      %p61 = scmp.eq.s32.totalorder %s26, 0
      %p62 = por %p60, %p61
      %p63 = scmp.ne.s32.totalorder %s55, %s57
      %p64 = scmp.eq.s32.totalorder %s31, 1
      %p65 = por %p63, %p64
      %p66 = scmp.ne.s32.totalorder %s57, %s58
      %p67 = scmp.eq.s32.totalorder %s31, 0
      %p68 = por %p66, %p67
      %p69 = scmp.ne.s32.totalorder %s57, %s58
      %p70 = scmp.eq.s32.totalorder %s32, 1
      %p71 = por %p69, %p70
      %p73 = scmp.ne.s32.totalorder %s58, %s72
      %p74 = scmp.eq.s32.totalorder %s32, 0
      %p75 = por %p73, %p74
      %s76 = ssub.s32 %s26, %s33
      %p77 = scmp.eq.s32.totalorder %s76, 0
      %s79 = sadd.s32 %s78, 1
      %s80 = scalar_select %p77, %s78, %s79
      %p83 = pneg %p77
      %p84 = scmp.eq.s32.totalorder %s26, 1
      %p85 = por %p83, %p84
      %p86 = scmp.ne.s32.totalorder %s78, %s81
      %p87 = scmp.eq.s32.totalorder %s26, 0
      %p88 = por %p86, %p87
      %p89 = scmp.ne.s32.totalorder %s78, %s81
      %p90 = scmp.eq.s32.totalorder %s31, 1
      %p91 = por %p89, %p90
      %p92 = scmp.ne.s32.totalorder %s81, %s82
      %p93 = scmp.eq.s32.totalorder %s31, 0
      %p94 = por %p92, %p93
      %p95 = scmp.ne.s32.totalorder %s81, %s82
      %p96 = scmp.eq.s32.totalorder %s32, 1
      %p97 = por %p95, %p96
      %p99 = scmp.ne.s32.totalorder %s82, %s98
      %p100 = scmp.eq.s32.totalorder %s32, 0
      %p101 = por %p99, %p100
      %s102 = ssub.s32 %s26, %s33
      %p103 = scmp.eq.s32.totalorder %s102, 0
      %s105 = sadd.s32 %s104, 1
      %s106 = scalar_select %p103, %s104, %s105
      %p109 = pneg %p103
      %p110 = scmp.eq.s32.totalorder %s26, 1
      %p111 = por %p109, %p110
      %p112 = scmp.ne.s32.totalorder %s104, %s107
      %p113 = scmp.eq.s32.totalorder %s26, 0
      %p114 = por %p112, %p113
      %p115 = scmp.ne.s32.totalorder %s104, %s107
      %p116 = scmp.eq.s32.totalorder %s31, 1
      %p117 = por %p115, %p116
      %p118 = scmp.ne.s32.totalorder %s107, %s108
      %p119 = scmp.eq.s32.totalorder %s31, 0
      %p120 = por %p118, %p119
      %p121 = scmp.ne.s32.totalorder %s107, %s108
      %p122 = scmp.eq.s32.totalorder %s32, 1
      %p123 = por %p121, %p122
      %p125 = scmp.ne.s32.totalorder %s108, %s124
      %p126 = scmp.eq.s32.totalorder %s32, 0
      %p127 = por %p125, %p126
      %s128 = ssub.s32 %s26, %s33
      %p129 = scmp.eq.s32.totalorder %s128, 0
      %s131 = sadd.s32 %s130, 1
      %s132 = scalar_select %p129, %s130, %s131
      %p135 = pneg %p129
      %p136 = scmp.eq.s32.totalorder %s26, 1
      %p137 = por %p135, %p136
      %p138 = scmp.ne.s32.totalorder %s130, %s133
      %p139 = scmp.eq.s32.totalorder %s26, 0
      %p140 = por %p138, %p139
      %p141 = scmp.ne.s32.totalorder %s130, %s133
      %p142 = scmp.eq.s32.totalorder %s31, 1
      %p143 = por %p141, %p142
      %p144 = scmp.ne.s32.totalorder %s133, %s134
      %p145 = scmp.eq.s32.totalorder %s31, 0
      %p146 = por %p144, %p145
      %p147 = scmp.ne.s32.totalorder %s133, %s134
      %p148 = scmp.eq.s32.totalorder %s32, 1
      %p149 = por %p147, %p148
      %p151 = scmp.ne.s32.totalorder %s134, %s150
      %p152 = scmp.eq.s32.totalorder %s32, 0
      %p153 = por %p151, %p152
      %s154 = ssub.s32 %s26, %s33
      %p155 = scmp.eq.s32.totalorder %s154, 0
      %s157 = sadd.s32 %s156, 1
      %s158 = scalar_select %p155, %s156, %s157
      %p161 = pneg %p155
      %p162 = scmp.eq.s32.totalorder %s26, 1
      %p163 = por %p161, %p162
      %p164 = scmp.ne.s32.totalorder %s156, %s159
      %p165 = scmp.eq.s32.totalorder %s26, 0
      %p166 = por %p164, %p165
      %p167 = scmp.ne.s32.totalorder %s156, %s159
      %p168 = scmp.eq.s32.totalorder %s31, 1
      %p169 = por %p167, %p168
      %p170 = scmp.ne.s32.totalorder %s159, %s160
      %p171 = scmp.eq.s32.totalorder %s31, 0
      %p172 = por %p170, %p171
      %p173 = scmp.ne.s32.totalorder %s159, %s160
      %p174 = scmp.eq.s32.totalorder %s32, 1
      %p175 = por %p173, %p174
      %p177 = scmp.ne.s32.totalorder %s160, %s176
      %p178 = scmp.eq.s32.totalorder %s32, 0
      %p179 = por %p177, %p178
      %s181 = sadd.s32 %s180, 1
      %p184 = scmp.eq.s32.totalorder %s26, 1
      %p185 = scmp.ne.s32.totalorder %s180, %s182
      %p186 = scmp.eq.s32.totalorder %s26, 0
      %p187 = por %p185, %p186
      %p188 = scmp.ne.s32.totalorder %s180, %s182
      %p189 = scmp.eq.s32.totalorder %s31, 1
      %p190 = por %p188, %p189
      %p191 = scmp.ne.s32.totalorder %s182, %s183
      %p192 = scmp.eq.s32.totalorder %s31, 0
      %p193 = por %p191, %p192
      %p194 = scmp.ne.s32.totalorder %s182, %s183
      %p195 = scmp.eq.s32.totalorder %s32, 1
      %p196 = por %p194, %p195
      %p198 = scmp.ne.s32.totalorder %s183, %s197
      %p199 = scmp.eq.s32.totalorder %s32, 0
      %p200 = por %p198, %p199
      %s202 = sadd.s32 %s201, 1
      %p205 = scmp.eq.s32.totalorder %s26, 1
      %p206 = scmp.ne.s32.totalorder %s201, %s203
      %p207 = scmp.eq.s32.totalorder %s26, 0
      %p208 = por %p206, %p207
      %p209 = scmp.ne.s32.totalorder %s201, %s203
      %p210 = scmp.eq.s32.totalorder %s31, 1
      %p211 = por %p209, %p210
      %p212 = scmp.ne.s32.totalorder %s203, %s204
      %p213 = scmp.eq.s32.totalorder %s31, 0
      %p214 = por %p212, %p213
      %p215 = scmp.ne.s32.totalorder %s203, %s204
      %p216 = scmp.eq.s32.totalorder %s32, 1
      %p217 = por %p215, %p216
      %p219 = scmp.ne.s32.totalorder %s204, %s218
      %p220 = scmp.eq.s32.totalorder %s32, 0
      %p221 = por %p219, %p220
      %s223 = sadd.s32 %s222, 1
      %p226 = scmp.eq.s32.totalorder %s26, 1
      %p227 = scmp.ne.s32.totalorder %s222, %s224
      %p228 = scmp.eq.s32.totalorder %s26, 0
      %p229 = por %p227, %p228
      %p230 = scmp.ne.s32.totalorder %s222, %s224
      %p231 = scmp.eq.s32.totalorder %s31, 1
      %p232 = por %p230, %p231
      %p233 = scmp.ne.s32.totalorder %s224, %s225
      %p234 = scmp.eq.s32.totalorder %s31, 0
      %p235 = por %p233, %p234
      %p236 = scmp.ne.s32.totalorder %s224, %s225
      %p237 = scmp.eq.s32.totalorder %s32, 1
      %p238 = por %p236, %p237
      %p240 = scmp.ne.s32.totalorder %s225, %s239
      %p241 = scmp.eq.s32.totalorder %s32, 0
      %p242 = por %p240, %p241
      %s244 = sadd.s32 %s243, 1
      %p247 = scmp.eq.s32.totalorder %s26, 1
      %p248 = scmp.ne.s32.totalorder %s243, %s245
      %p249 = scmp.eq.s32.totalorder %s26, 0
      %p250 = por %p248, %p249
      %p251 = scmp.ne.s32.totalorder %s243, %s245
      %p252 = scmp.eq.s32.totalorder %s31, 1
      %p253 = por %p251, %p252
      %p254 = scmp.ne.s32.totalorder %s245, %s246
      %p255 = scmp.eq.s32.totalorder %s31, 0
      %p256 = por %p254, %p255
      %p257 = scmp.ne.s32.totalorder %s245, %s246
      %p258 = scmp.eq.s32.totalorder %s32, 1
      %p259 = por %p257, %p258
      %p261 = scmp.ne.s32.totalorder %s246, %s260
      %p262 = scmp.eq.s32.totalorder %s32, 0
      %p263 = por %p261, %p262
      %s265 = sadd.s32 %s264, 1
      %p268 = scmp.eq.s32.totalorder %s26, 1
      %p269 = scmp.ne.s32.totalorder %s264, %s266
      %p270 = scmp.eq.s32.totalorder %s26, 0
      %p271 = por %p269, %p270
      %p272 = scmp.ne.s32.totalorder %s264, %s266
      %p273 = scmp.eq.s32.totalorder %s31, 1
      %p274 = por %p272, %p273
      %p275 = scmp.ne.s32.totalorder %s266, %s267
      %p276 = scmp.eq.s32.totalorder %s31, 0
      %p277 = por %p275, %p276
      %p278 = scmp.ne.s32.totalorder %s266, %s267
      %p279 = scmp.eq.s32.totalorder %s32, 1
      %p280 = por %p278, %p279
      %p282 = scmp.ne.s32.totalorder %s267, %s281
      %p283 = scmp.eq.s32.totalorder %s32, 0
      %p284 = por %p282, %p283
      %s286 = sadd.s32 %s285, 1
      %p289 = scmp.eq.s32.totalorder %s26, 1
      %p290 = scmp.ne.s32.totalorder %s285, %s287
      %p291 = scmp.eq.s32.totalorder %s26, 0
      %p292 = por %p290, %p291
      %p293 = scmp.ne.s32.totalorder %s285, %s287
      %p294 = scmp.eq.s32.totalorder %s31, 1
      %p295 = por %p293, %p294
      %p296 = scmp.ne.s32.totalorder %s287, %s288
      %p297 = scmp.eq.s32.totalorder %s31, 0
      %p298 = por %p296, %p297
      %p299 = scmp.ne.s32.totalorder %s287, %s288
      %p300 = scmp.eq.s32.totalorder %s32, 1
      %p301 = por %p299, %p300
      %p303 = scmp.ne.s32.totalorder %s288, %s302
      %p304 = scmp.eq.s32.totalorder %s32, 0
      %p305 = por %p303, %p304
      %p306 = scmp.le.s32.totalorder 1, %s26
      %p307 = scmp.lt.s32.totalorder %s26, 3
      %p308 = pnand %p306, %p307
      %p309 = pneg %p308
      // Predicated region
      $region9: #{tpu_custom_call.1} parent=5 // pred_check
        _
      $region10: #{tpu_custom_call.1} parent=5 // pred_check_branch
        %311 = sbr.rel (%p308) target = $region12
      $region11: #{tpu_custom_call.1} parent=5 // pred_region
        %s312 = ssub.s32 %s26, 1
        // Predicated region
        $region13: #{tpu_custom_call.1} parent=11 // pred_check
          %p313 = pneg %p47
        $region14: #{tpu_custom_call.1} parent=11 // pred_check_branch
          %315 = sbr.rel (%p313) target = $region16
        $region15: #{tpu_custom_call.1} parent=11 // pred_region
          _
        $region16: #{tpu_custom_call.1} parent=11 // pred_fallthru
          _
        // Predicated region
        $region17: #{tpu_custom_call.1} parent=11 // pred_check
          %p316 = pneg %p68
        $region18: #{tpu_custom_call.1} parent=11 // pred_check_branch
          %318 = sbr.rel (%p316) target = $region20
        $region19: #{tpu_custom_call.1} parent=11 // pred_region
          _
        $region20: #{tpu_custom_call.1} parent=11 // pred_fallthru
          _
        // Predicated region
        $region21: #{tpu_custom_call.1} parent=11 // pred_check
          %p319 = pneg %p193
        $region22: #{tpu_custom_call.1} parent=11 // pred_check_branch
          %321 = sbr.rel (%p319) target = $region24
        $region23: #{tpu_custom_call.1} parent=11 // pred_region
          _
        $region24: #{tpu_custom_call.1} parent=11 // pred_fallthru
          _
        // Predicated region
        $region25: #{tpu_custom_call.1} parent=11 // pred_check
          %p322 = pneg %p214
        $region26: #{tpu_custom_call.1} parent=11 // pred_check_branch
          %324 = sbr.rel (%p322) target = $region28
        $region27: #{tpu_custom_call.1} parent=11 // pred_region
          _
        $region28: #{tpu_custom_call.1} parent=11 // pred_fallthru
          _
        // Predicated region
        $region29: #{tpu_custom_call.1} parent=11 // pred_check
          %p325 = pneg %p235
        $region30: #{tpu_custom_call.1} parent=11 // pred_check_branch
          %327 = sbr.rel (%p325) target = $region32
        $region31: #{tpu_custom_call.1} parent=11 // pred_region
          %s329 = ssub.s32 6144, 6144
          %330 = vsyncadd [#allocation7], %s329
          %s331 = sshll.u32 [#allocation8], 4
          %s332 = int_to_ptr.vmem [resolvable:$true] %s331
          %337 = dma.hbm_to_vmem [thread:$0]  %s8, 6144, %s332, [#allocation7], 384, 384, 24
        $region32: #{tpu_custom_call.1} parent=11 // pred_fallthru
          _
        // Predicated region
        $region33: #{tpu_custom_call.1} parent=11 // pred_check
          %p338 = pneg %p256
        $region34: #{tpu_custom_call.1} parent=11 // pred_check_branch
          %340 = sbr.rel (%p338) target = $region36
        $region35: #{tpu_custom_call.1} parent=11 // pred_region
          _
        $region36: #{tpu_custom_call.1} parent=11 // pred_fallthru
          _
      $region12: #{tpu_custom_call.1} parent=5 // pred_fallthru
        _
      %p341 = scmp.lt.s32.totalorder %s26, 2
      // Predicated region
      $region37: #{tpu_custom_call.1} parent=5 // pred_check
        %p342 = pneg %p341
      $region38: #{tpu_custom_call.1} parent=5 // pred_check_branch
        %344 = sbr.rel (%p342) target = $region40
      $region39: #{tpu_custom_call.1} parent=5 // pred_region
        // Predicated region
        $region41: #{tpu_custom_call.1} parent=39 // pred_check
          %p345 = pneg %p88
        $region42: #{tpu_custom_call.1} parent=39 // pred_check_branch
          %347 = sbr.rel (%p345) target = $region44
        $region43: #{tpu_custom_call.1} parent=39 // pred_region
          %s348 = sand.u32 %s78, 1
          %s349 = scalar_lea.sflag [#allocation4], %s348
          %s350 = sand.u32 %s78, 1
          %s351 = smul.addr %s350, 384
          %s352 = scalar_lea.vmem [#allocation3], %s351
          %s353 = smul.u32 16, %s26
          %s355 = ssub.s32 6144, 6144
          %356 = vsyncadd %s349, %s355
          %s357 = smul.addr %s353, 3
          %s358 = smul.addr %s357, 128
          %s359 = scalar_lea.hbm %s2, %s358
          %s360 = sshll.u32 %s352, 4
          %s361 = int_to_ptr.vmem [resolvable:$true] %s360
          %366 = dma.hbm_to_vmem [thread:$0]  %s359, 6144, %s361, %s349, 384, 384, 24
        $region44: #{tpu_custom_call.1} parent=39 // pred_fallthru
          _
        // Predicated region
        $region45: #{tpu_custom_call.1} parent=39 // pred_check
          %p367 = pneg %p114
        $region46: #{tpu_custom_call.1} parent=39 // pred_check_branch
          %369 = sbr.rel (%p367) target = $region48
        $region47: #{tpu_custom_call.1} parent=39 // pred_region
          %s370 = sand.u32 %s26, 1
          %s371 = scalar_lea.sflag [#allocation7], %s370
          %s372 = sand.u32 %s104, 1
          %s373 = smul.addr %s372, 384
          %s374 = scalar_lea.vmem [#allocation6], %s373
          %s375 = smul.u32 16, %s26
          %s377 = ssub.s32 6144, 6144
          %378 = vsyncadd %s371, %s377
          %s379 = smul.addr %s375, 3
          %s380 = smul.addr %s379, 128
          %s381 = scalar_lea.hbm %s3, %s380
          %s382 = sshll.u32 %s374, 4
          %s383 = int_to_ptr.vmem [resolvable:$true] %s382
          %388 = dma.hbm_to_vmem [thread:$0]  %s381, 6144, %s383, %s371, 384, 384, 24
        $region48: #{tpu_custom_call.1} parent=39 // pred_fallthru
          _
        // Predicated region
        $region49: #{tpu_custom_call.1} parent=39 // pred_check
          %p389 = pneg %p140
        $region50: #{tpu_custom_call.1} parent=39 // pred_check_branch
          %391 = sbr.rel (%p389) target = $region52
        $region51: #{tpu_custom_call.1} parent=39 // pred_region
          %s392 = smul.u32 16, %s26
          %p393 = scmp.lt.s32.totalorder %s392, 31
          %s394 = scalar_select %p393, %s392, 31
          %s395 = smul.addr %s394, 8
          %s396 = scalar_lea.vmem %s4, %s395
          %s397 = smul.u32 16, %s26
        $region52: #{tpu_custom_call.1} parent=39 // pred_fallthru
          _
        // Predicated region
        $region53: #{tpu_custom_call.1} parent=39 // pred_check
          %p398 = pneg %p166
        $region54: #{tpu_custom_call.1} parent=39 // pred_check_branch
          %400 = sbr.rel (%p398) target = $region56
        $region55: #{tpu_custom_call.1} parent=39 // pred_region
          %p401 = scmp.lt.s32.totalorder %s26, 1
          %s402 = scalar_select %p401, %s26, 1
          %s403 = scalar_lea.vmem %s5, %s402
        $region56: #{tpu_custom_call.1} parent=39 // pred_fallthru
          _
      $region40: #{tpu_custom_call.1} parent=5 // pred_fallthru
        _
      %p404 = scmp.le.s32.totalorder 1, %s26
      %p405 = scmp.lt.s32.totalorder %s26, 3
      %p406 = pnand %p404, %p405
      %p407 = pneg %p406
      // Predicated region
      $region57: #{tpu_custom_call.1} parent=5 // pred_check
        _
      $region58: #{tpu_custom_call.1} parent=5 // pred_check_branch
        %409 = sbr.rel (%p406) target = $region60
      $region59: #{tpu_custom_call.1} parent=5 // pred_region
        %s410 = ssub.s32 %s26, 1
        %s411 = sand.u32 %s81, 1
        %s412 = scalar_lea.sflag [#allocation4], %s411
        %s413 = sand.u32 %s81, 1
        %s414 = smul.addr %s413, 384
        %s415 = scalar_lea.vmem [#allocation3], %s414
        // Predicated region
        $region61: #{tpu_custom_call.1} parent=59 // pred_check
          %p416 = pneg %p94
        $region62: #{tpu_custom_call.1} parent=59 // pred_check_branch
          %418 = sbr.rel (%p416) target = $region64
        $region63: #{tpu_custom_call.1} parent=59 // pred_region
          %419 = dma.done %s412, 6144
        $region64: #{tpu_custom_call.1} parent=59 // pred_fallthru
          _
        %s420 = sand.u32 %s31, 1
        %s421 = scalar_lea.sflag [#allocation7], %s420
        %s422 = sand.u32 %s107, 1
        %s423 = smul.addr %s422, 384
        %s424 = scalar_lea.vmem [#allocation6], %s423
        // Predicated region
        $region65: #{tpu_custom_call.1} parent=59 // pred_check
          %p425 = pneg %p120
        $region66: #{tpu_custom_call.1} parent=59 // pred_check_branch
          %427 = sbr.rel (%p425) target = $region68
        $region67: #{tpu_custom_call.1} parent=59 // pred_region
          %428 = dma.done %s421, 6144
        $region68: #{tpu_custom_call.1} parent=59 // pred_fallthru
          _
        // Predicated region
        $region69: #{tpu_custom_call.1} parent=59 // pred_check
          %p429 = pneg %p235
        $region70: #{tpu_custom_call.1} parent=59 // pred_check_branch
          %431 = sbr.rel (%p429) target = $region72
        $region71: #{tpu_custom_call.1} parent=59 // pred_region
          %432 = dma.done [#allocation7], 6144
        $region72: #{tpu_custom_call.1} parent=59 // pred_fallthru
          _
        %p433 = pneg %p47
        %p434 = pneg %p44
        %p435 = pneg %p68
        %p436 = pneg %p65
        %s437 = sand.u32 %s81, 1
        %s438 = scalar_lea.sflag [#allocation4], %s437
        %s439 = sand.u32 %s81, 1
        %s440 = smul.addr %s439, 384
        %s441 = scalar_lea.vmem [#allocation3], %s440
        %p442 = pneg %p94
        %p443 = pneg %p91
        %s444 = sand.u32 %s31, 1
        %s445 = scalar_lea.sflag [#allocation7], %s444
        %s446 = sand.u32 %s107, 1
        %s447 = smul.addr %s446, 384
        %s448 = scalar_lea.vmem [#allocation6], %s447
        %p449 = pneg %p120
        %p450 = pneg %p117
        %s451 = smul.u32 16, %s31
        %p452 = scmp.lt.s32.totalorder %s451, 31
        %s453 = scalar_select %p452, %s451, 31
        %s454 = smul.addr %s453, 8
        %s455 = scalar_lea.vmem %s4, %s454
        %p456 = pneg %p146
        %p457 = pneg %p143
        %p458 = scmp.lt.s32.totalorder %s31, 1
        %s459 = scalar_select %p458, %s31, 1
        %s460 = scalar_lea.vmem %s5, %s459
        %p461 = pneg %p172
        %p462 = pneg %p169
        %p463 = pneg %p193
        %p464 = pneg %p190
        %p465 = pneg %p214
        %p466 = pneg %p211
        %p467 = pneg %p235
        %p468 = pneg %p232
        %p469 = pneg %p256
        %p470 = pneg %p253
        %p471 = pneg %p277
        %p472 = pneg %p274
        %p473 = pneg %p298
        %p474 = pneg %p295
        %s475 = smul.u32 16, %s31
        %s476 = smul.u32 16, %s31
        %s477 = smul.u32 16, %s31
        %p478 = scmp.lt.s32.totalorder %s477, 31
        %s479 = scalar_select %p478, %s477, 31
        %s480 = smul.addr %s479, 8
        %s481 = scalar_lea.vmem %s4, %s480
        %s482 = smul.u32 16, %s31
        %p483 = scmp.lt.s32.totalorder %s31, 1
        %s484 = scalar_select %p483, %s31, 1
        %s485 = scalar_lea.vmem %s5, %s484
        %p486 = scmp.eq.s32.totalorder %s31, 0
        // Predicated region
        $region73: #{tpu_custom_call.1} parent=59 // pred_check
          %p487 = pneg %p486
        $region74: #{tpu_custom_call.1} parent=59 // pred_check_branch
          %489 = sbr.rel (%p487) target = $region76
        $region75: #{tpu_custom_call.1} parent=59 // pred_region
          %v490 = vld [vmem:[%s0] sm:$0xff]
          %v491 = vld [vmem:[%s6] sm:$0xff]
          %v492 = vld [vmem:[%s6 + $0x8] sm:$0xff]
          %v493 = vld [vmem:[%s6 + $0x10] sm:$0xff]
          %v494 = vld [vmem:[%s6 + $0x18] sm:$0xff]
          %v495 = vld [vmem:[%s6 + $0x20] sm:$0xff]
          %v496 = vld [vmem:[%s6 + $0x28] sm:$0xff]
          %v497 = vld [vmem:[%s6 + $0x30] sm:$0xff]
          %v498 = vld [vmem:[%s6 + $0x38] sm:$0xff]
          %v499 = vld [vmem:[%s6 + $0x40] sm:$0xff]
          %v500 = vld [vmem:[%s6 + $0x48] sm:$0xff]
          %v501 = vld [vmem:[%s6 + $0x50] sm:$0xff]
          %v502 = vld [vmem:[%s6 + $0x58] sm:$0xff]
          %v503 = vld [vmem:[%s6 + $0x60] sm:$0xff]
          %v504 = vld [vmem:[%s6 + $0x68] sm:$0xff]
          %v505 = vld [vmem:[%s6 + $0x70] sm:$0xff]
          %v506 = vld [vmem:[%s6 + $0x78] sm:$0xff]
          %v507 = vld [vmem:[%s7] sm:$0x1]
          %v509 = vlaneseq
          %v510 = vshrl.u32 %v509, 7
          %v511 = vsub.s32 0, %v510
          %v512 = vrot.slane %v507, %v511
          %514 = vmatprep.subr.mxu0 0.0
          %515 = vmatpush1.msra.mxu0 %v491
          %516 = vmatprep.subr.mxu0 0.0
          %517 = vmatpush1.msra.mxu0 %v492
          %518 = vmatprep.subr.mxu0 0.0
          %519 = vmatpush1.msra.mxu0 %v493
          %520 = vmatprep.subr.mxu0 0.0
          %521 = vmatpush1.msra.mxu0 %v494
          %522 = vmatprep.subr.mxu0 0.0
          %523 = vmatpush1.msra.mxu0 %v495
          %524 = vmatprep.subr.mxu0 0.0
          %525 = vmatpush1.msra.mxu0 %v496
          %526 = vmatprep.subr.mxu0 0.0
          %527 = vmatpush1.msra.mxu0 %v497
          %528 = vmatprep.subr.mxu0 0.0
          %529 = vmatpush1.msra.mxu0 %v498
          %530 = vmatprep.subr.mxu0 0.0
          %531 = vmatpush1.msra.mxu0 %v499
          %532 = vmatprep.subr.mxu0 0.0
          %533 = vmatpush1.msra.mxu0 %v500
          %534 = vmatprep.subr.mxu0 0.0
          %535 = vmatpush1.msra.mxu0 %v501
          %536 = vmatprep.subr.mxu0 0.0
          %537 = vmatpush1.msra.mxu0 %v502
          %538 = vmatprep.subr.mxu0 0.0
          %539 = vmatpush1.msra.mxu0 %v503
          %540 = vmatprep.subr.mxu0 0.0
          %541 = vmatpush1.msra.mxu0 %v504
          %542 = vmatprep.subr.mxu0 0.0
          %543 = vmatpush1.msra.mxu0 %v505
          %544 = vmatprep.subr.mxu0 0.0
          %545 = vmatpush1.msra.mxu0 %v506
          %546 = vmatprep.subr.mxu0 0.0
          %547 = vmatpush1.msra.mxu0 0.0
          %548 = vmatprep.subr.mxu0 0.0
          %549 = vmatpush1.msra.mxu0 0.0
          %550 = vmatprep.subr.mxu0 0.0
          %551 = vmatpush1.msra.mxu0 0.0
          %552 = vmatprep.subr.mxu0 0.0
          %553 = vmatpush1.msra.mxu0 0.0
          %554 = vmatprep.subr.mxu0 0.0
          %555 = vmatpush1.msra.mxu0 0.0
          %556 = vmatprep.subr.mxu0 0.0
          %557 = vmatpush1.msra.mxu0 0.0
          %558 = vmatprep.subr.mxu0 0.0
          %559 = vmatpush1.msra.mxu0 0.0
          %560 = vmatprep.subr.mxu0 0.0
          %561 = vmatpush1.msra.mxu0 0.0
          %562 = vmatprep.subr.mxu0 0.0
          %563 = vmatpush1.msra.mxu0 0.0
          %564 = vmatprep.subr.mxu0 0.0
          %565 = vmatpush1.msra.mxu0 0.0
          %566 = vmatprep.subr.mxu0 0.0
          %567 = vmatpush1.msra.mxu0 0.0
          %568 = vmatprep.subr.mxu0 0.0
          %569 = vmatpush1.msra.mxu0 0.0
          %570 = vmatprep.subr.mxu0 0.0
          %571 = vmatpush1.msra.mxu0 0.0
          %572 = vmatprep.subr.mxu0 0.0
          %573 = vmatpush1.msra.mxu0 0.0
          %574 = vmatprep.subr.mxu0 0.0
          %575 = vmatpush1.msra.mxu0 0.0
          %576 = vmatprep.subr.mxu0 0.0
          %577 = vmatpush1.msra.mxu0 0.0
          %578 = vmatprep.mubr.f32.mxu0 0.0
          %579 = vmatmul.mubr.f32.gmra.mrb[0].mxu0 %v490
          %v580 = vpop.f32.mrb[0].mxu0
          %v581 = vadd.f32 %v512, %v580
          %v582 = vpop.f32.mrb[0].mxu0
          %583 = vdwg.mxu0
          %v584 = vxor.u32 %v581, 2147483648
          %v585 = vmul.f32 %v584, 1.442695
          %v586 = vpow.pop %v585
          %v587 = vadd.f32 %v586, 1.0
          %v588 = vrcp.pop %v587
          %v589 = vmul.f32 1.0, %v588
          %v590 = vmul.f32 %v581, %v589
          %v591 = vld [vmem:[#allocation8] sm:$0xff]
          %v592 = vld [vmem:[#allocation8 + $0x8] sm:$0xff]
          %v593 = vld [vmem:[#allocation8 + $0x10] sm:$0xff]
          %v594 = vld [vmem:[#allocation8 + $0x18] sm:$0xff]
          %v595 = vld [vmem:[#allocation8 + $0x20] sm:$0xff]
          %v596 = vld [vmem:[#allocation8 + $0x28] sm:$0xff]
          %v597 = vld [vmem:[#allocation8 + $0x30] sm:$0xff]
          %v598 = vld [vmem:[#allocation8 + $0x38] sm:$0xff]
          %v599 = vld [vmem:[#allocation8 + $0x40] sm:$0xff]
          %v600 = vld [vmem:[#allocation8 + $0x48] sm:$0xff]
          %v601 = vld [vmem:[#allocation8 + $0x50] sm:$0xff]
          %v602 = vld [vmem:[#allocation8 + $0x58] sm:$0xff]
          %v603 = vld [vmem:[#allocation8 + $0x60] sm:$0xff]
          %v604 = vld [vmem:[#allocation8 + $0x68] sm:$0xff]
          %v605 = vld [vmem:[#allocation8 + $0x70] sm:$0xff]
          %v606 = vld [vmem:[#allocation8 + $0x78] sm:$0xff]
          %v607 = vld [vmem:[#allocation8 + $0x80] sm:$0xff]
          %v608 = vld [vmem:[#allocation8 + $0x88] sm:$0xff]
          %v609 = vld [vmem:[#allocation8 + $0x90] sm:$0xff]
          %v610 = vld [vmem:[#allocation8 + $0x98] sm:$0xff]
          %v611 = vld [vmem:[#allocation8 + $0xa0] sm:$0xff]
          %v612 = vld [vmem:[#allocation8 + $0xa8] sm:$0xff]
          %v613 = vld [vmem:[#allocation8 + $0xb0] sm:$0xff]
          %v614 = vld [vmem:[#allocation8 + $0xb8] sm:$0xff]
          %v615 = vld [vmem:[#allocation8 + $0xc0] sm:$0xff]
          %v616 = vld [vmem:[#allocation8 + $0xc8] sm:$0xff]
          %v617 = vld [vmem:[#allocation8 + $0xd0] sm:$0xff]
          %v618 = vld [vmem:[#allocation8 + $0xd8] sm:$0xff]
          %v619 = vld [vmem:[#allocation8 + $0xe0] sm:$0xff]
          %v620 = vld [vmem:[#allocation8 + $0xe8] sm:$0xff]
          %v621 = vld [vmem:[#allocation8 + $0xf0] sm:$0xff]
          %v622 = vld [vmem:[#allocation8 + $0xf8] sm:$0xff]
          %v623 = vld [vmem:[#allocation8 + $0x100] sm:$0xff]
          %v624 = vld [vmem:[#allocation8 + $0x108] sm:$0xff]
          %v625 = vld [vmem:[#allocation8 + $0x110] sm:$0xff]
          %v626 = vld [vmem:[#allocation8 + $0x118] sm:$0xff]
          %v627 = vld [vmem:[#allocation8 + $0x120] sm:$0xff]
          %v628 = vld [vmem:[#allocation8 + $0x128] sm:$0xff]
          %v629 = vld [vmem:[#allocation8 + $0x130] sm:$0xff]
          %v630 = vld [vmem:[#allocation8 + $0x138] sm:$0xff]
          %v631 = vld [vmem:[#allocation8 + $0x140] sm:$0xff]
          %v632 = vld [vmem:[#allocation8 + $0x148] sm:$0xff]
          %v633 = vld [vmem:[#allocation8 + $0x150] sm:$0xff]
          %v634 = vld [vmem:[#allocation8 + $0x158] sm:$0xff]
          %v635 = vld [vmem:[#allocation8 + $0x160] sm:$0xff]
          %v636 = vld [vmem:[#allocation8 + $0x168] sm:$0xff]
          %v637 = vld [vmem:[#allocation8 + $0x170] sm:$0xff]
          %v638 = vld [vmem:[#allocation8 + $0x178] sm:$0xff]
          %v639 = vld [vmem:[%s9] sm:$0x7]
          %v641 = vlaneseq
          %v642 = vshrl.u32 %v641, 7
          %v643 = vsub.s32 0, %v642
          %v644 = vrot.slane %v639, %v643
          %v645 = vlaneseq
          %v646 = vshrl.u32 %v645, 7
          %v647 = vsub.s32 1, %v646
          %v648 = vrot.slane %v639, %v647
          %v649 = vlaneseq
          %v650 = vshrl.u32 %v649, 7
          %v651 = vsub.s32 2, %v650
          %v652 = vrot.slane %v639, %v651
          %656 = vmatprep.subr.mxu0 %v592
          %657 = vmatpush1.msra.mxu0 %v591
          %658 = vmatprep.subr.mxu0 %v595
          %659 = vmatpush1.msra.mxu0 %v594
          %660 = vmatprep.subr.mxu0 %v598
          %661 = vmatpush1.msra.mxu0 %v597
          %662 = vmatprep.subr.mxu0 %v601
          %663 = vmatpush1.msra.mxu0 %v600
          %664 = vmatprep.subr.mxu0 %v604
          %665 = vmatpush1.msra.mxu0 %v603
          %666 = vmatprep.subr.mxu0 %v607
          %667 = vmatpush1.msra.mxu0 %v606
          %668 = vmatprep.subr.mxu0 %v610
          %669 = vmatpush1.msra.mxu0 %v609
          %670 = vmatprep.subr.mxu0 %v613
          %671 = vmatpush1.msra.mxu0 %v612
          %672 = vmatprep.subr.mxu0 %v616
          %673 = vmatpush1.msra.mxu0 %v615
          %674 = vmatprep.subr.mxu0 %v619
          %675 = vmatpush1.msra.mxu0 %v618
          %676 = vmatprep.subr.mxu0 %v622
          %677 = vmatpush1.msra.mxu0 %v621
          %678 = vmatprep.subr.mxu0 %v625
          %679 = vmatpush1.msra.mxu0 %v624
          %680 = vmatprep.subr.mxu0 %v628
          %681 = vmatpush1.msra.mxu0 %v627
          %682 = vmatprep.subr.mxu0 %v631
          %683 = vmatpush1.msra.mxu0 %v630
          %684 = vmatprep.subr.mxu0 %v634
          %685 = vmatpush1.msra.mxu0 %v633
          %686 = vmatprep.subr.mxu0 %v637
          %687 = vmatpush1.msra.mxu0 %v636
          %688 = vmatprep.subr.mxu0 0.0
          %689 = vmatpush1.msra.mxu0 0.0
          %690 = vmatprep.subr.mxu0 0.0
          %691 = vmatpush1.msra.mxu0 0.0
          %692 = vmatprep.subr.mxu0 0.0
          %693 = vmatpush1.msra.mxu0 0.0
          %694 = vmatprep.subr.mxu0 0.0
          %695 = vmatpush1.msra.mxu0 0.0
          %696 = vmatprep.subr.mxu0 0.0
          %697 = vmatpush1.msra.mxu0 0.0
          %698 = vmatprep.subr.mxu0 0.0
          %699 = vmatpush1.msra.mxu0 0.0
          %700 = vmatprep.subr.mxu0 0.0
          %701 = vmatpush1.msra.mxu0 0.0
          %702 = vmatprep.subr.mxu0 0.0
          %703 = vmatpush1.msra.mxu0 0.0
          %704 = vmatprep.subr.mxu0 0.0
          %705 = vmatpush1.msra.mxu0 0.0
          %706 = vmatprep.subr.mxu0 0.0
          %707 = vmatpush1.msra.mxu0 0.0
          %708 = vmatprep.subr.mxu0 0.0
          %709 = vmatpush1.msra.mxu0 0.0
          %710 = vmatprep.subr.mxu0 0.0
          %711 = vmatpush1.msra.mxu0 0.0
          %712 = vmatprep.subr.mxu0 0.0
          %713 = vmatpush1.msra.mxu0 0.0
          %714 = vmatprep.subr.mxu0 0.0
          %715 = vmatpush1.msra.mxu0 0.0
          %716 = vmatprep.subr.mxu0 0.0
          %717 = vmatpush1.msra.mxu0 0.0
          %718 = vmatprep.subr.mxu0 0.0
          %719 = vmatpush1.msra.mxu0 0.0
          %720 = vmatprep.mubr.f32.mxu0 0.0
          %721 = vmatmul.mubr.f32.gmra.mrb[0].mxu0 %v590
          %v722 = vpop.f32.mrb[0].mxu0
          %v723 = vadd.f32 %v644, %v722
          %v724 = vpop.f32.mrb[0].mxu0
          %v725 = vadd.f32 %v648, %v724
          %726 = vdwg.mxu0
          %727 = vmatprep.subr.mxu0 0.0
          %728 = vmatpush1.msra.mxu0 %v593
          %729 = vmatprep.subr.mxu0 0.0
          %730 = vmatpush1.msra.mxu0 %v596
          %731 = vmatprep.subr.mxu0 0.0
          %732 = vmatpush1.msra.mxu0 %v599
          %733 = vmatprep.subr.mxu0 0.0
          %734 = vmatpush1.msra.mxu0 %v602
          %735 = vmatprep.subr.mxu0 0.0
          %736 = vmatpush1.msra.mxu0 %v605
          %737 = vmatprep.subr.mxu0 0.0
          %738 = vmatpush1.msra.mxu0 %v608
          %739 = vmatprep.subr.mxu0 0.0
          %740 = vmatpush1.msra.mxu0 %v611
          %741 = vmatprep.subr.mxu0 0.0
          %742 = vmatpush1.msra.mxu0 %v614
          %743 = vmatprep.subr.mxu0 0.0
          %744 = vmatpush1.msra.mxu0 %v617
          %745 = vmatprep.subr.mxu0 0.0
          %746 = vmatpush1.msra.mxu0 %v620
          %747 = vmatprep.subr.mxu0 0.0
          %748 = vmatpush1.msra.mxu0 %v623
          %749 = vmatprep.subr.mxu0 0.0
          %750 = vmatpush1.msra.mxu0 %v626
          %751 = vmatprep.subr.mxu0 0.0
          %752 = vmatpush1.msra.mxu0 %v629
          %753 = vmatprep.subr.mxu0 0.0
          %754 = vmatpush1.msra.mxu0 %v632
          %755 = vmatprep.subr.mxu0 0.0
          %756 = vmatpush1.msra.mxu0 %v635
          %757 = vmatprep.subr.mxu0 0.0
          %758 = vmatpush1.msra.mxu0 %v638
          %759 = vmatprep.subr.mxu0 0.0
          %760 = vmatpush1.msra.mxu0 0.0
          %761 = vmatprep.subr.mxu0 0.0
          %762 = vmatpush1.msra.mxu0 0.0
          %763 = vmatprep.subr.mxu0 0.0
          %764 = vmatpush1.msra.mxu0 0.0
          %765 = vmatprep.subr.mxu0 0.0
          %766 = vmatpush1.msra.mxu0 0.0
          %767 = vmatprep.subr.mxu0 0.0
          %768 = vmatpush1.msra.mxu0 0.0
          %769 = vmatprep.subr.mxu0 0.0
          %770 = vmatpush1.msra.mxu0 0.0
          %771 = vmatprep.subr.mxu0 0.0
          %772 = vmatpush1.msra.mxu0 0.0
          %773 = vmatprep.subr.mxu0 0.0
          %774 = vmatpush1.msra.mxu0 0.0
          %775 = vmatprep.subr.mxu0 0.0
          %776 = vmatpush1.msra.mxu0 0.0
          %777 = vmatprep.subr.mxu0 0.0
          %778 = vmatpush1.msra.mxu0 0.0
          %779 = vmatprep.subr.mxu0 0.0
          %780 = vmatpush1.msra.mxu0 0.0
          %781 = vmatprep.subr.mxu0 0.0
          %782 = vmatpush1.msra.mxu0 0.0
          %783 = vmatprep.subr.mxu0 0.0
          %784 = vmatpush1.msra.mxu0 0.0
          %785 = vmatprep.subr.mxu0 0.0
          %786 = vmatpush1.msra.mxu0 0.0
          %787 = vmatprep.subr.mxu0 0.0
          %788 = vmatpush1.msra.mxu0 0.0
          %789 = vmatprep.subr.mxu0 0.0
          %790 = vmatpush1.msra.mxu0 0.0
          %791 = vmatprep.mubr.f32.mxu0 0.0
          %792 = vmatmul.mubr.f32.gmra.mrb[0].mxu0 %v590
          %v793 = vpop.f32.mrb[0].mxu0
          %v794 = vadd.f32 %v652, %v793
          %v795 = vpop.f32.mrb[0].mxu0
          %796 = vdwg.mxu0
          %797 = vst [vmem:[#allocation2] sm:$0xff] %v723
          %798 = vst [vmem:[#allocation2 + $0x8] sm:$0xff] %v725
          %799 = vst [vmem:[#allocation2 + $0x10] sm:$0xff] %v794
          %800 = vst [vmem:[#allocation9] sm:$0xff] %v490
          %v801 = vld [vmem:[%s1] sm:$0xff]
          %v802 = vld [vmem:[%s1 + $0x8] sm:$0xff]
          %v803 = vld [vmem:[%s1 + $0x10] sm:$0xff]
          %804 = vst [vmem:[#allocation10] sm:$0xff] %v801
          %805 = vst [vmem:[#allocation10 + $0x8] sm:$0xff] %v802
          %806 = vst [vmem:[#allocation10 + $0x10] sm:$0xff] %v803
        $region76: #{tpu_custom_call.1} parent=59 // pred_fallthru
          _
        %v807 = vlaneseq
        %v808 = vand.u32 %v807, 127
        %v809 = vld [vmem:[%s481] sm:$0xff]
        %v810 = vld [vmem:[%s481 + $0x8] sm:$0xff]
        %v811 = vld [vmem:[%s481 + $0x10] sm:$0xff]
        %v812 = vld [vmem:[%s481 + $0x18] sm:$0xff]
        %v813 = vld [vmem:[%s481 + $0x20] sm:$0xff]
        %v814 = vld [vmem:[%s481 + $0x28] sm:$0xff]
        %v815 = vld [vmem:[%s481 + $0x30] sm:$0xff]
        %v816 = vld [vmem:[%s481 + $0x38] sm:$0xff]
        %v817 = vld [vmem:[%s481 + $0x40] sm:$0xff]
        %v818 = vld [vmem:[%s481 + $0x48] sm:$0xff]
        %v819 = vld [vmem:[%s481 + $0x50] sm:$0xff]
        %v820 = vld [vmem:[%s481 + $0x58] sm:$0xff]
        %v821 = vld [vmem:[%s481 + $0x60] sm:$0xff]
        %v822 = vld [vmem:[%s481 + $0x68] sm:$0xff]
        %v823 = vld [vmem:[%s481 + $0x70] sm:$0xff]
        %v824 = vld [vmem:[%s481 + $0x78] sm:$0xff]
        %825 = vset.pattern.permute.xlu0 0
        %826 = vperm.xlu0 %825, %v809
        %v827 = vpop.permute.xlu0 %826
        %828 = vset.pattern.permute.xlu0 0
        %829 = vperm.xlu0 %828, %v810
        %v830 = vpop.permute.xlu0 %829
        %831 = vset.pattern.permute.xlu0 0
        %832 = vperm.xlu0 %831, %v811
        %v833 = vpop.permute.xlu0 %832
        %834 = vset.pattern.permute.xlu0 0
        %835 = vperm.xlu0 %834, %v812
        %v836 = vpop.permute.xlu0 %835
        %837 = vset.pattern.permute.xlu0 0
        %838 = vperm.xlu0 %837, %v813
        %v839 = vpop.permute.xlu0 %838
        %840 = vset.pattern.permute.xlu0 0
        %841 = vperm.xlu0 %840, %v814
        %v842 = vpop.permute.xlu0 %841
        %843 = vset.pattern.permute.xlu0 0
        %844 = vperm.xlu0 %843, %v815
        %v845 = vpop.permute.xlu0 %844
        %846 = vset.pattern.permute.xlu0 0
        %847 = vperm.xlu0 %846, %v816
        %v848 = vpop.permute.xlu0 %847
        %849 = vset.pattern.permute.xlu0 0
        %850 = vperm.xlu0 %849, %v817
        %v851 = vpop.permute.xlu0 %850
        %852 = vset.pattern.permute.xlu0 0
        %853 = vperm.xlu0 %852, %v818
        %v854 = vpop.permute.xlu0 %853
        %855 = vset.pattern.permute.xlu0 0
        %856 = vperm.xlu0 %855, %v819
        %v857 = vpop.permute.xlu0 %856
        %858 = vset.pattern.permute.xlu0 0
        %859 = vperm.xlu0 %858, %v820
        %v860 = vpop.permute.xlu0 %859
        %861 = vset.pattern.permute.xlu0 0
        %862 = vperm.xlu0 %861, %v821
        %v863 = vpop.permute.xlu0 %862
        %864 = vset.pattern.permute.xlu0 0
        %865 = vperm.xlu0 %864, %v822
        %v866 = vpop.permute.xlu0 %865
        %867 = vset.pattern.permute.xlu0 0
        %868 = vperm.xlu0 %867, %v823
        %v869 = vpop.permute.xlu0 %868
        %870 = vset.pattern.permute.xlu0 0
        %871 = vperm.xlu0 %870, %v824
        %v872 = vpop.permute.xlu0 %871
        %vm873 = vcmp.eq.s32.totalorder %v808, %v827
        %vm874 = vcmp.eq.s32.totalorder %v808, %v830
        %vm875 = vcmp.eq.s32.totalorder %v808, %v833
        %vm876 = vcmp.eq.s32.totalorder %v808, %v836
        %vm877 = vcmp.eq.s32.totalorder %v808, %v839
        %vm878 = vcmp.eq.s32.totalorder %v808, %v842
        %vm879 = vcmp.eq.s32.totalorder %v808, %v845
        %vm880 = vcmp.eq.s32.totalorder %v808, %v848
        %vm881 = vcmp.eq.s32.totalorder %v808, %v851
        %vm882 = vcmp.eq.s32.totalorder %v808, %v854
        %vm883 = vcmp.eq.s32.totalorder %v808, %v857
        %vm884 = vcmp.eq.s32.totalorder %v808, %v860
        %vm885 = vcmp.eq.s32.totalorder %v808, %v863
        %vm886 = vcmp.eq.s32.totalorder %v808, %v866
        %vm887 = vcmp.eq.s32.totalorder %v808, %v869
        %vm888 = vcmp.eq.s32.totalorder %v808, %v872
        %v889 = vsel %vm873, 1, 0
        %v890 = vsel %vm874, 1, 0
        %v891 = vsel %vm875, 1, 0
        %v892 = vsel %vm876, 1, 0
        %v893 = vsel %vm877, 1, 0
        %v894 = vsel %vm878, 1, 0
        %v895 = vsel %vm879, 1, 0
        %v896 = vsel %vm880, 1, 0
        %v897 = vsel %vm881, 1, 0
        %v898 = vsel %vm882, 1, 0
        %v899 = vsel %vm883, 1, 0
        %v900 = vsel %vm884, 1, 0
        %v901 = vsel %vm885, 1, 0
        %v902 = vsel %vm886, 1, 0
        %v903 = vsel %vm887, 1, 0
        %v904 = vsel %vm888, 1, 0
        %v905 = vcvt.s32.f32 %v889
        %v906 = vcvt.s32.f32 %v890
        %v907 = vcvt.s32.f32 %v891
        %v908 = vcvt.s32.f32 %v892
        %v909 = vcvt.s32.f32 %v893
        %v910 = vcvt.s32.f32 %v894
        %v911 = vcvt.s32.f32 %v895
        %v912 = vcvt.s32.f32 %v896
        %v913 = vcvt.s32.f32 %v897
        %v914 = vcvt.s32.f32 %v898
        %v915 = vcvt.s32.f32 %v899
        %v916 = vcvt.s32.f32 %v900
        %v917 = vcvt.s32.f32 %v901
        %v918 = vcvt.s32.f32 %v902
        %v919 = vcvt.s32.f32 %v903
        %v920 = vcvt.s32.f32 %v904
        %v921 = vld [vmem:[#allocation2] sm:$0xff]
        %v922 = vld [vmem:[#allocation2 + $0x8] sm:$0xff]
        %v923 = vld [vmem:[#allocation2 + $0x10] sm:$0xff]
        %vm924 = vcmask 64512
        %v926 = vsel %vm924, %v905, 0
        %v929 = vsel %vm924, %v906, 0
        %v932 = vsel %vm924, %v907, 0
        %v935 = vsel %vm924, %v908, 0
        %v938 = vsel %vm924, %v909, 0
        %v941 = vsel %vm924, %v910, 0
        %v944 = vsel %vm924, %v911, 0
        %v947 = vsel %vm924, %v912, 0
        %v950 = vsel %vm924, %v913, 0
        %v953 = vsel %vm924, %v914, 0
        %v956 = vsel %vm924, %v915, 0
        %v959 = vsel %vm924, %v916, 0
        %v962 = vsel %vm924, %v917, 0
        %v965 = vsel %vm924, %v918, 0
        %v968 = vsel %vm924, %v919, 0
        %v971 = vsel %vm924, %v920, 0
        %973 = vmatprep.subr.mxu0 %v922
        %974 = vmatpush1.msra.mxu0 %v921
        %975 = vmatprep.subr.mxu0 0.0
        %976 = vmatpush1.msra.mxu0 0.0
        %977 = vmatprep.subr.mxu0 0.0
        %978 = vmatpush1.msra.mxu0 0.0
        %979 = vmatprep.subr.mxu0 0.0
        %980 = vmatpush1.msra.mxu0 0.0
        %981 = vmatprep.subr.mxu0 0.0
        %982 = vmatpush1.msra.mxu0 0.0
        %983 = vmatprep.subr.mxu0 0.0
        %984 = vmatpush1.msra.mxu0 0.0
        %985 = vmatprep.subr.mxu0 0.0
        %986 = vmatpush1.msra.mxu0 0.0
        %987 = vmatprep.subr.mxu0 0.0
        %988 = vmatpush1.msra.mxu0 0.0
        %989 = vmatprep.subr.mxu0 0.0
        %990 = vmatpush1.msra.mxu0 0.0
        %991 = vmatprep.subr.mxu0 0.0
        %992 = vmatpush1.msra.mxu0 0.0
        %993 = vmatprep.subr.mxu0 0.0
        %994 = vmatpush1.msra.mxu0 0.0
        %995 = vmatprep.subr.mxu0 0.0
        %996 = vmatpush1.msra.mxu0 0.0
        %997 = vmatprep.subr.mxu0 0.0
        %998 = vmatpush1.msra.mxu0 0.0
        %999 = vmatprep.subr.mxu0 0.0
        %1000 = vmatpush1.msra.mxu0 0.0
        %1001 = vmatprep.subr.mxu0 0.0
        %1002 = vmatpush1.msra.mxu0 0.0
        %1003 = vmatprep.subr.mxu0 0.0
        %1004 = vmatpush1.msra.mxu0 0.0
        %1005 = vmatprep.subr.mxu0 0.0
        %1006 = vmatpush1.msra.mxu0 0.0
        %1007 = vmatprep.subr.mxu0 0.0
        %1008 = vmatpush1.msra.mxu0 0.0
        %1009 = vmatprep.subr.mxu0 0.0
        %1010 = vmatpush1.msra.mxu0 0.0
        %1011 = vmatprep.subr.mxu0 0.0
        %1012 = vmatpush1.msra.mxu0 0.0
        %1013 = vmatprep.subr.mxu0 0.0
        %1014 = vmatpush1.msra.mxu0 0.0
        %1015 = vmatprep.subr.mxu0 0.0
        %1016 = vmatpush1.msra.mxu0 0.0
        %1017 = vmatprep.subr.mxu0 0.0
        %1018 = vmatpush1.msra.mxu0 0.0
        %1019 = vmatprep.subr.mxu0 0.0
        %1020 = vmatpush1.msra.mxu0 0.0
        %1021 = vmatprep.subr.mxu0 0.0
        %1022 = vmatpush1.msra.mxu0 0.0
        %1023 = vmatprep.subr.mxu0 0.0
        %1024 = vmatpush1.msra.mxu0 0.0
        %1025 = vmatprep.subr.mxu0 0.0
        %1026 = vmatpush1.msra.mxu0 0.0
        %1027 = vmatprep.subr.mxu0 0.0
        %1028 = vmatpush1.msra.mxu0 0.0
        %1029 = vmatprep.subr.mxu0 0.0
        %1030 = vmatpush1.msra.mxu0 0.0
        %1031 = vmatprep.subr.mxu0 0.0
        %1032 = vmatpush1.msra.mxu0 0.0
        %1033 = vmatprep.subr.mxu0 0.0
        %1034 = vmatpush1.msra.mxu0 0.0
        %1035 = vmatprep.subr.mxu0 0.0
        %1036 = vmatpush1.msra.mxu0 0.0
        %1037 = vmatprep.mubr.f32.mxu0 0.0
        %1038 = vmatmul.mubr.f32.gmra.mrb[0].mxu0 %v926
        %v1039 = vpop.f32.mrb[0].mxu0
        %v1040 = vadd.f32 0.0, %v1039
        %v1041 = vpop.f32.mrb[0].mxu0
        %v1042 = vadd.f32 0.0, %v1041
        %1043 = vmatprep.mubr.f32.mxu0 0.0
        %1044 = vmatmul.mubr.f32.gmra.mrb[0].mxu0 %v929
        %v1045 = vpop.f32.mrb[0].mxu0
        %v1046 = vadd.f32 0.0, %v1045
        %v1047 = vpop.f32.mrb[0].mxu0
        %v1048 = vadd.f32 0.0, %v1047
        %1049 = vmatprep.mubr.f32.mxu0 0.0
        %1050 = vmatmul.mubr.f32.gmra.mrb[0].mxu0 %v932
        %v1051 = vpop.f32.mrb[0].mxu0
        %v1052 = vadd.f32 0.0, %v1051
        %v1053 = vpop.f32.mrb[0].mxu0
        %v1054 = vadd.f32 0.0, %v1053
        %1055 = vmatprep.mubr.f32.mxu0 0.0
        %1056 = vmatmul.mubr.f32.gmra.mrb[0].mxu0 %v935
        %v1057 = vpop.f32.mrb[0].mxu0
        %v1058 = vadd.f32 0.0, %v1057
        %v1059 = vpop.f32.mrb[0].mxu0
        %v1060 = vadd.f32 0.0, %v1059
        %1061 = vmatprep.mubr.f32.mxu0 0.0
        %1062 = vmatmul.mubr.f32.gmra.mrb[0].mxu0 %v938
        %v1063 = vpop.f32.mrb[0].mxu0
        %v1064 = vadd.f32 0.0, %v1063
        %v1065 = vpop.f32.mrb[0].mxu0
        %v1066 = vadd.f32 0.0, %v1065
        %1067 = vmatprep.mubr.f32.mxu0 0.0
        %1068 = vmatmul.mubr.f32.gmra.mrb[0].mxu0 %v941
        %v1069 = vpop.f32.mrb[0].mxu0
        %v1070 = vadd.f32 0.0, %v1069
        %v1071 = vpop.f32.mrb[0].mxu0
        %v1072 = vadd.f32 0.0, %v1071
        %1073 = vmatprep.mubr.f32.mxu0 0.0
        %1074 = vmatmul.mubr.f32.gmra.mrb[0].mxu0 %v944
        %v1075 = vpop.f32.mrb[0].mxu0
        %v1076 = vadd.f32 0.0, %v1075
        %v1077 = vpop.f32.mrb[0].mxu0
        %v1078 = vadd.f32 0.0, %v1077
        %1079 = vmatprep.mubr.f32.mxu0 0.0
        %1080 = vmatmul.mubr.f32.gmra.mrb[0].mxu0 %v947
        %v1081 = vpop.f32.mrb[0].mxu0
        %v1082 = vadd.f32 0.0, %v1081
        %v1083 = vpop.f32.mrb[0].mxu0
        %v1084 = vadd.f32 0.0, %v1083
        %1085 = vmatprep.mubr.f32.mxu0 0.0
        %1086 = vmatmul.mubr.f32.gmra.mrb[0].mxu0 %v950
        %v1087 = vpop.f32.mrb[0].mxu0
        %v1088 = vadd.f32 0.0, %v1087
        %v1089 = vpop.f32.mrb[0].mxu0
        %v1090 = vadd.f32 0.0, %v1089
        %1091 = vmatprep.mubr.f32.mxu0 0.0
        %1092 = vmatmul.mubr.f32.gmra.mrb[0].mxu0 %v953
        %v1093 = vpop.f32.mrb[0].mxu0
        %v1094 = vadd.f32 0.0, %v1093
        %v1095 = vpop.f32.mrb[0].mxu0
        %v1096 = vadd.f32 0.0, %v1095
        %1097 = vmatprep.mubr.f32.mxu0 0.0
        %1098 = vmatmul.mubr.f32.gmra.mrb[0].mxu0 %v956
        %v1099 = vpop.f32.mrb[0].mxu0
        %v1100 = vadd.f32 0.0, %v1099
        %v1101 = vpop.f32.mrb[0].mxu0
        %v1102 = vadd.f32 0.0, %v1101
        %1103 = vmatprep.mubr.f32.mxu0 0.0
        %1104 = vmatmul.mubr.f32.gmra.mrb[0].mxu0 %v959
        %v1105 = vpop.f32.mrb[0].mxu0
        %v1106 = vadd.f32 0.0, %v1105
        %v1107 = vpop.f32.mrb[0].mxu0
        %v1108 = vadd.f32 0.0, %v1107
        %1109 = vmatprep.mubr.f32.mxu0 0.0
        %1110 = vmatmul.mubr.f32.gmra.mrb[0].mxu0 %v962
        %v1111 = vpop.f32.mrb[0].mxu0
        %v1112 = vadd.f32 0.0, %v1111
        %v1113 = vpop.f32.mrb[0].mxu0
        %v1114 = vadd.f32 0.0, %v1113
        %1115 = vmatprep.mubr.f32.mxu0 0.0
        %1116 = vmatmul.mubr.f32.gmra.mrb[0].mxu0 %v965
        %v1117 = vpop.f32.mrb[0].mxu0
        %v1118 = vadd.f32 0.0, %v1117
        %v1119 = vpop.f32.mrb[0].mxu0
        %v1120 = vadd.f32 0.0, %v1119
        %1121 = vmatprep.mubr.f32.mxu0 0.0
        %1122 = vmatmul.mubr.f32.gmra.mrb[0].mxu0 %v968
        %v1123 = vpop.f32.mrb[0].mxu0
        %v1124 = vadd.f32 0.0, %v1123
        %v1125 = vpop.f32.mrb[0].mxu0
        %v1126 = vadd.f32 0.0, %v1125
        %1127 = vmatprep.mubr.f32.mxu0 0.0
        %1128 = vmatmul.mubr.f32.gmra.mrb[0].mxu0 %v971
        %v1129 = vpop.f32.mrb[0].mxu0
        %v1130 = vadd.f32 0.0, %v1129
        %v1131 = vpop.f32.mrb[0].mxu0
        %v1132 = vadd.f32 0.0, %v1131
        %1133 = vdwg.mxu0
        %1134 = vmatprep.subr.mxu0 0.0
        %1135 = vmatpush1.msra.mxu0 %v923
        %1136 = vmatprep.subr.mxu0 0.0
        %1137 = vmatpush1.msra.mxu0 0.0
        %1138 = vmatprep.subr.mxu0 0.0
        %1139 = vmatpush1.msra.mxu0 0.0
        %1140 = vmatprep.subr.mxu0 0.0
        %1141 = vmatpush1.msra.mxu0 0.0
        %1142 = vmatprep.subr.mxu0 0.0
        %1143 = vmatpush1.msra.mxu0 0.0
        %1144 = vmatprep.subr.mxu0 0.0
        %1145 = vmatpush1.msra.mxu0 0.0
        %1146 = vmatprep.subr.mxu0 0.0
        %1147 = vmatpush1.msra.mxu0 0.0
        %1148 = vmatprep.subr.mxu0 0.0
        %1149 = vmatpush1.msra.mxu0 0.0
        %1150 = vmatprep.subr.mxu0 0.0
        %1151 = vmatpush1.msra.mxu0 0.0
        %1152 = vmatprep.subr.mxu0 0.0
        %1153 = vmatpush1.msra.mxu0 0.0
        %1154 = vmatprep.subr.mxu0 0.0
        %1155 = vmatpush1.msra.mxu0 0.0
        %1156 = vmatprep.subr.mxu0 0.0
        %1157 = vmatpush1.msra.mxu0 0.0
        %1158 = vmatprep.subr.mxu0 0.0
        %1159 = vmatpush1.msra.mxu0 0.0
        %1160 = vmatprep.subr.mxu0 0.0
        %1161 = vmatpush1.msra.mxu0 0.0
        %1162 = vmatprep.subr.mxu0 0.0
        %1163 = vmatpush1.msra.mxu0 0.0
        %1164 = vmatprep.subr.mxu0 0.0
        %1165 = vmatpush1.msra.mxu0 0.0
        %1166 = vmatprep.subr.mxu0 0.0
        %1167 = vmatpush1.msra.mxu0 0.0
        %1168 = vmatprep.subr.mxu0 0.0
        %1169 = vmatpush1.msra.mxu0 0.0
        %1170 = vmatprep.subr.mxu0 0.0
        %1171 = vmatpush1.msra.mxu0 0.0
        %1172 = vmatprep.subr.mxu0 0.0
        %1173 = vmatpush1.msra.mxu0 0.0
        %1174 = vmatprep.subr.mxu0 0.0
        %1175 = vmatpush1.msra.mxu0 0.0
        %1176 = vmatprep.subr.mxu0 0.0
        %1177 = vmatpush1.msra.mxu0 0.0
        %1178 = vmatprep.subr.mxu0 0.0
        %1179 = vmatpush1.msra.mxu0 0.0
        %1180 = vmatprep.subr.mxu0 0.0
        %1181 = vmatpush1.msra.mxu0 0.0
        %1182 = vmatprep.subr.mxu0 0.0
        %1183 = vmatpush1.msra.mxu0 0.0
        %1184 = vmatprep.subr.mxu0 0.0
        %1185 = vmatpush1.msra.mxu0 0.0
        %1186 = vmatprep.subr.mxu0 0.0
        %1187 = vmatpush1.msra.mxu0 0.0
        %1188 = vmatprep.subr.mxu0 0.0
        %1189 = vmatpush1.msra.mxu0 0.0
        %1190 = vmatprep.subr.mxu0 0.0
        %1191 = vmatpush1.msra.mxu0 0.0
        %1192 = vmatprep.subr.mxu0 0.0
        %1193 = vmatpush1.msra.mxu0 0.0
        %1194 = vmatprep.subr.mxu0 0.0
        %1195 = vmatpush1.msra.mxu0 0.0
        %1196 = vmatprep.subr.mxu0 0.0
        %1197 = vmatpush1.msra.mxu0 0.0
        %1198 = vmatprep.mubr.f32.mxu0 0.0
        %1199 = vmatmul.mubr.f32.gmra.mrb[0].mxu0 %v926
        %v1200 = vpop.f32.mrb[0].mxu0
        %v1201 = vadd.f32 0.0, %v1200
        %v1202 = vpop.f32.mrb[0].mxu0
        %1203 = vmatprep.mubr.f32.mxu0 0.0
        %1204 = vmatmul.mubr.f32.gmra.mrb[0].mxu0 %v929
        %v1205 = vpop.f32.mrb[0].mxu0
        %v1206 = vadd.f32 0.0, %v1205
        %v1207 = vpop.f32.mrb[0].mxu0
        %1208 = vmatprep.mubr.f32.mxu0 0.0
        %1209 = vmatmul.mubr.f32.gmra.mrb[0].mxu0 %v932
        %v1210 = vpop.f32.mrb[0].mxu0
        %v1211 = vadd.f32 0.0, %v1210
        %v1212 = vpop.f32.mrb[0].mxu0
        %1213 = vmatprep.mubr.f32.mxu0 0.0
        %1214 = vmatmul.mubr.f32.gmra.mrb[0].mxu0 %v935
        %v1215 = vpop.f32.mrb[0].mxu0
        %v1216 = vadd.f32 0.0, %v1215
        %v1217 = vpop.f32.mrb[0].mxu0
        %1218 = vmatprep.mubr.f32.mxu0 0.0
        %1219 = vmatmul.mubr.f32.gmra.mrb[0].mxu0 %v938
        %v1220 = vpop.f32.mrb[0].mxu0
        %v1221 = vadd.f32 0.0, %v1220
        %v1222 = vpop.f32.mrb[0].mxu0
        %1223 = vmatprep.mubr.f32.mxu0 0.0
        %1224 = vmatmul.mubr.f32.gmra.mrb[0].mxu0 %v941
        %v1225 = vpop.f32.mrb[0].mxu0
        %v1226 = vadd.f32 0.0, %v1225
        %v1227 = vpop.f32.mrb[0].mxu0
        %1228 = vmatprep.mubr.f32.mxu0 0.0
        %1229 = vmatmul.mubr.f32.gmra.mrb[0].mxu0 %v944
        %v1230 = vpop.f32.mrb[0].mxu0
        %v1231 = vadd.f32 0.0, %v1230
        %v1232 = vpop.f32.mrb[0].mxu0
        %1233 = vmatprep.mubr.f32.mxu0 0.0
        %1234 = vmatmul.mubr.f32.gmra.mrb[0].mxu0 %v947
        %v1235 = vpop.f32.mrb[0].mxu0
        %v1236 = vadd.f32 0.0, %v1235
        %v1237 = vpop.f32.mrb[0].mxu0
        %1238 = vmatprep.mubr.f32.mxu0 0.0
        %1239 = vmatmul.mubr.f32.gmra.mrb[0].mxu0 %v950
        %v1240 = vpop.f32.mrb[0].mxu0
        %v1241 = vadd.f32 0.0, %v1240
        %v1242 = vpop.f32.mrb[0].mxu0
        %1243 = vmatprep.mubr.f32.mxu0 0.0
        %1244 = vmatmul.mubr.f32.gmra.mrb[0].mxu0 %v953
        %v1245 = vpop.f32.mrb[0].mxu0
        %v1246 = vadd.f32 0.0, %v1245
        %v1247 = vpop.f32.mrb[0].mxu0
        %1248 = vmatprep.mubr.f32.mxu0 0.0
        %1249 = vmatmul.mubr.f32.gmra.mrb[0].mxu0 %v956
        %v1250 = vpop.f32.mrb[0].mxu0
        %v1251 = vadd.f32 0.0, %v1250
        %v1252 = vpop.f32.mrb[0].mxu0
        %1253 = vmatprep.mubr.f32.mxu0 0.0
        %1254 = vmatmul.mubr.f32.gmra.mrb[0].mxu0 %v959
        %v1255 = vpop.f32.mrb[0].mxu0
        %v1256 = vadd.f32 0.0, %v1255
        %v1257 = vpop.f32.mrb[0].mxu0
        %1258 = vmatprep.mubr.f32.mxu0 0.0
        %1259 = vmatmul.mubr.f32.gmra.mrb[0].mxu0 %v962
        %v1260 = vpop.f32.mrb[0].mxu0
        %v1261 = vadd.f32 0.0, %v1260
        %v1262 = vpop.f32.mrb[0].mxu0
        %1263 = vmatprep.mubr.f32.mxu0 0.0
        %1264 = vmatmul.mubr.f32.gmra.mrb[0].mxu0 %v965
        %v1265 = vpop.f32.mrb[0].mxu0
        %v1266 = vadd.f32 0.0, %v1265
        %v1267 = vpop.f32.mrb[0].mxu0
        %1268 = vmatprep.mubr.f32.mxu0 0.0
        %1269 = vmatmul.mubr.f32.gmra.mrb[0].mxu0 %v968
        %v1270 = vpop.f32.mrb[0].mxu0
        %v1271 = vadd.f32 0.0, %v1270
        %v1272 = vpop.f32.mrb[0].mxu0
        %1273 = vmatprep.mubr.f32.mxu0 0.0
        %1274 = vmatmul.mubr.f32.gmra.mrb[0].mxu0 %v971
        %v1275 = vpop.f32.mrb[0].mxu0
        %v1276 = vadd.f32 0.0, %v1275
        %v1277 = vpop.f32.mrb[0].mxu0
        %1278 = vdwg.mxu0
        %v1279 = vld [vmem:[%s1] sm:$0xff]
        %v1280 = vld [vmem:[%s1 + $0x8] sm:$0xff]
        %v1281 = vld [vmem:[%s1 + $0x10] sm:$0xff]
        %1282 = vmatprep.subr.mxu0 %v1280
        %1283 = vmatpush1.msra.mxu0 %v1279
        %1284 = vmatprep.subr.mxu0 0.0
        %1285 = vmatpush1.msra.mxu0 0.0
        %1286 = vmatprep.subr.mxu0 0.0
        %1287 = vmatpush1.msra.mxu0 0.0
        %1288 = vmatprep.subr.mxu0 0.0
        %1289 = vmatpush1.msra.mxu0 0.0
        %1290 = vmatprep.subr.mxu0 0.0
        %1291 = vmatpush1.msra.mxu0 0.0
        %1292 = vmatprep.subr.mxu0 0.0
        %1293 = vmatpush1.msra.mxu0 0.0
        %1294 = vmatprep.subr.mxu0 0.0
        %1295 = vmatpush1.msra.mxu0 0.0
        %1296 = vmatprep.subr.mxu0 0.0
        %1297 = vmatpush1.msra.mxu0 0.0
        %1298 = vmatprep.subr.mxu0 0.0
        %1299 = vmatpush1.msra.mxu0 0.0
        %1300 = vmatprep.subr.mxu0 0.0
        %1301 = vmatpush1.msra.mxu0 0.0
        %1302 = vmatprep.subr.mxu0 0.0
        %1303 = vmatpush1.msra.mxu0 0.0
        %1304 = vmatprep.subr.mxu0 0.0
        %1305 = vmatpush1.msra.mxu0 0.0
        %1306 = vmatprep.subr.mxu0 0.0
        %1307 = vmatpush1.msra.mxu0 0.0
        %1308 = vmatprep.subr.mxu0 0.0
        %1309 = vmatpush1.msra.mxu0 0.0
        %1310 = vmatprep.subr.mxu0 0.0
        %1311 = vmatpush1.msra.mxu0 0.0
        %1312 = vmatprep.subr.mxu0 0.0
        %1313 = vmatpush1.msra.mxu0 0.0
        %1314 = vmatprep.subr.mxu0 0.0
        %1315 = vmatpush1.msra.mxu0 0.0
        %1316 = vmatprep.subr.mxu0 0.0
        %1317 = vmatpush1.msra.mxu0 0.0
        %1318 = vmatprep.subr.mxu0 0.0
        %1319 = vmatpush1.msra.mxu0 0.0
        %1320 = vmatprep.subr.mxu0 0.0
        %1321 = vmatpush1.msra.mxu0 0.0
        %1322 = vmatprep.subr.mxu0 0.0
        %1323 = vmatpush1.msra.mxu0 0.0
        %1324 = vmatprep.subr.mxu0 0.0
        %1325 = vmatpush1.msra.mxu0 0.0
        %1326 = vmatprep.subr.mxu0 0.0
        %1327 = vmatpush1.msra.mxu0 0.0
        %1328 = vmatprep.subr.mxu0 0.0
        %1329 = vmatpush1.msra.mxu0 0.0
        %1330 = vmatprep.subr.mxu0 0.0
        %1331 = vmatpush1.msra.mxu0 0.0
        %1332 = vmatprep.subr.mxu0 0.0
        %1333 = vmatpush1.msra.mxu0 0.0
        %1334 = vmatprep.subr.mxu0 0.0
        %1335 = vmatpush1.msra.mxu0 0.0
        %1336 = vmatprep.subr.mxu0 0.0
        %1337 = vmatpush1.msra.mxu0 0.0
        %1338 = vmatprep.subr.mxu0 0.0
        %1339 = vmatpush1.msra.mxu0 0.0
        %1340 = vmatprep.subr.mxu0 0.0
        %1341 = vmatpush1.msra.mxu0 0.0
        %1342 = vmatprep.subr.mxu0 0.0
        %1343 = vmatpush1.msra.mxu0 0.0
        %1344 = vmatprep.subr.mxu0 0.0
        %1345 = vmatpush1.msra.mxu0 0.0
        %1346 = vmatprep.mubr.f32.mxu0 0.0
        %1347 = vmatmul.mubr.f32.gmra.mrb[0].mxu0 %v926
        %v1348 = vpop.f32.mrb[0].mxu0
        %v1349 = vadd.f32 0.0, %v1348
        %v1350 = vpop.f32.mrb[0].mxu0
        %v1351 = vadd.f32 0.0, %v1350
        %1352 = vmatprep.mubr.f32.mxu0 0.0
        %1353 = vmatmul.mubr.f32.gmra.mrb[0].mxu0 %v929
        %v1354 = vpop.f32.mrb[0].mxu0
        %v1355 = vadd.f32 0.0, %v1354
        %v1356 = vpop.f32.mrb[0].mxu0
        %v1357 = vadd.f32 0.0, %v1356
        %1358 = vmatprep.mubr.f32.mxu0 0.0
        %1359 = vmatmul.mubr.f32.gmra.mrb[0].mxu0 %v932
        %v1360 = vpop.f32.mrb[0].mxu0
        %v1361 = vadd.f32 0.0, %v1360
        %v1362 = vpop.f32.mrb[0].mxu0
        %v1363 = vadd.f32 0.0, %v1362
        %1364 = vmatprep.mubr.f32.mxu0 0.0
        %1365 = vmatmul.mubr.f32.gmra.mrb[0].mxu0 %v935
        %v1366 = vpop.f32.mrb[0].mxu0
        %v1367 = vadd.f32 0.0, %v1366
        %v1368 = vpop.f32.mrb[0].mxu0
        %v1369 = vadd.f32 0.0, %v1368
        %1370 = vmatprep.mubr.f32.mxu0 0.0
        %1371 = vmatmul.mubr.f32.gmra.mrb[0].mxu0 %v938
        %v1372 = vpop.f32.mrb[0].mxu0
        %v1373 = vadd.f32 0.0, %v1372
        %v1374 = vpop.f32.mrb[0].mxu0
        %v1375 = vadd.f32 0.0, %v1374
        %1376 = vmatprep.mubr.f32.mxu0 0.0
        %1377 = vmatmul.mubr.f32.gmra.mrb[0].mxu0 %v941
        %v1378 = vpop.f32.mrb[0].mxu0
        %v1379 = vadd.f32 0.0, %v1378
        %v1380 = vpop.f32.mrb[0].mxu0
        %v1381 = vadd.f32 0.0, %v1380
        %1382 = vmatprep.mubr.f32.mxu0 0.0
        %1383 = vmatmul.mubr.f32.gmra.mrb[0].mxu0 %v944
        %v1384 = vpop.f32.mrb[0].mxu0
        %v1385 = vadd.f32 0.0, %v1384
        %v1386 = vpop.f32.mrb[0].mxu0
        %v1387 = vadd.f32 0.0, %v1386
        %1388 = vmatprep.mubr.f32.mxu0 0.0
        %1389 = vmatmul.mubr.f32.gmra.mrb[0].mxu0 %v947
        %v1390 = vpop.f32.mrb[0].mxu0
        %v1391 = vadd.f32 0.0, %v1390
        %v1392 = vpop.f32.mrb[0].mxu0
        %v1393 = vadd.f32 0.0, %v1392
        %1394 = vmatprep.mubr.f32.mxu0 0.0
        %1395 = vmatmul.mubr.f32.gmra.mrb[0].mxu0 %v950
        %v1396 = vpop.f32.mrb[0].mxu0
        %v1397 = vadd.f32 0.0, %v1396
        %v1398 = vpop.f32.mrb[0].mxu0
        %v1399 = vadd.f32 0.0, %v1398
        %1400 = vmatprep.mubr.f32.mxu0 0.0
        %1401 = vmatmul.mubr.f32.gmra.mrb[0].mxu0 %v953
        %v1402 = vpop.f32.mrb[0].mxu0
        %v1403 = vadd.f32 0.0, %v1402
        %v1404 = vpop.f32.mrb[0].mxu0
        %v1405 = vadd.f32 0.0, %v1404
        %1406 = vmatprep.mubr.f32.mxu0 0.0
        %1407 = vmatmul.mubr.f32.gmra.mrb[0].mxu0 %v956
        %v1408 = vpop.f32.mrb[0].mxu0
        %v1409 = vadd.f32 0.0, %v1408
        %v1410 = vpop.f32.mrb[0].mxu0
        %v1411 = vadd.f32 0.0, %v1410
        %1412 = vmatprep.mubr.f32.mxu0 0.0
        %1413 = vmatmul.mubr.f32.gmra.mrb[0].mxu0 %v959
        %v1414 = vpop.f32.mrb[0].mxu0
        %v1415 = vadd.f32 0.0, %v1414
        %v1416 = vpop.f32.mrb[0].mxu0
        %v1417 = vadd.f32 0.0, %v1416
        %1418 = vmatprep.mubr.f32.mxu0 0.0
        %1419 = vmatmul.mubr.f32.gmra.mrb[0].mxu0 %v962
        %v1420 = vpop.f32.mrb[0].mxu0
        %v1421 = vadd.f32 0.0, %v1420
        %v1422 = vpop.f32.mrb[0].mxu0
        %v1423 = vadd.f32 0.0, %v1422
        %1424 = vmatprep.mubr.f32.mxu0 0.0
        %1425 = vmatmul.mubr.f32.gmra.mrb[0].mxu0 %v965
        %v1426 = vpop.f32.mrb[0].mxu0
        %v1427 = vadd.f32 0.0, %v1426
        %v1428 = vpop.f32.mrb[0].mxu0
        %v1429 = vadd.f32 0.0, %v1428
        %1430 = vmatprep.mubr.f32.mxu0 0.0
        %1431 = vmatmul.mubr.f32.gmra.mrb[0].mxu0 %v968
        %v1432 = vpop.f32.mrb[0].mxu0
        %v1433 = vadd.f32 0.0, %v1432
        %v1434 = vpop.f32.mrb[0].mxu0
        %v1435 = vadd.f32 0.0, %v1434
        %1436 = vmatprep.mubr.f32.mxu0 0.0
        %1437 = vmatmul.mubr.f32.gmra.mrb[0].mxu0 %v971
        %v1438 = vpop.f32.mrb[0].mxu0
        %v1439 = vadd.f32 0.0, %v1438
        %v1440 = vpop.f32.mrb[0].mxu0
        %v1441 = vadd.f32 0.0, %v1440
        %1442 = vdwg.mxu0
        %1443 = vmatprep.subr.mxu0 0.0
        %1444 = vmatpush1.msra.mxu0 %v1281
        %1445 = vmatprep.subr.mxu0 0.0
        %1446 = vmatpush1.msra.mxu0 0.0
        %1447 = vmatprep.subr.mxu0 0.0
        %1448 = vmatpush1.msra.mxu0 0.0
        %1449 = vmatprep.subr.mxu0 0.0
        %1450 = vmatpush1.msra.mxu0 0.0
        %1451 = vmatprep.subr.mxu0 0.0
        %1452 = vmatpush1.msra.mxu0 0.0
        %1453 = vmatprep.subr.mxu0 0.0
        %1454 = vmatpush1.msra.mxu0 0.0
        %1455 = vmatprep.subr.mxu0 0.0
        %1456 = vmatpush1.msra.mxu0 0.0
        %1457 = vmatprep.subr.mxu0 0.0
        %1458 = vmatpush1.msra.mxu0 0.0
        %1459 = vmatprep.subr.mxu0 0.0
        %1460 = vmatpush1.msra.mxu0 0.0
        %1461 = vmatprep.subr.mxu0 0.0
        %1462 = vmatpush1.msra.mxu0 0.0
        %1463 = vmatprep.subr.mxu0 0.0
        %1464 = vmatpush1.msra.mxu0 0.0
        %1465 = vmatprep.subr.mxu0 0.0
        %1466 = vmatpush1.msra.mxu0 0.0
        %1467 = vmatprep.subr.mxu0 0.0
        %1468 = vmatpush1.msra.mxu0 0.0
        %1469 = vmatprep.subr.mxu0 0.0
        %1470 = vmatpush1.msra.mxu0 0.0
        %1471 = vmatprep.subr.mxu0 0.0
        %1472 = vmatpush1.msra.mxu0 0.0
        %1473 = vmatprep.subr.mxu0 0.0
        %1474 = vmatpush1.msra.mxu0 0.0
        %1475 = vmatprep.subr.mxu0 0.0
        %1476 = vmatpush1.msra.mxu0 0.0
        %1477 = vmatprep.subr.mxu0 0.0
        %1478 = vmatpush1.msra.mxu0 0.0
        %1479 = vmatprep.subr.mxu0 0.0
        %1480 = vmatpush1.msra.mxu0 0.0
        %1481 = vmatprep.subr.mxu0 0.0
        %1482 = vmatpush1.msra.mxu0 0.0
        %1483 = vmatprep.subr.mxu0 0.0
        %1484 = vmatpush1.msra.mxu0 0.0
        %1485 = vmatprep.subr.mxu0 0.0
        %1486 = vmatpush1.msra.mxu0 0.0
        %1487 = vmatprep.subr.mxu0 0.0
        %1488 = vmatpush1.msra.mxu0 0.0
        %1489 = vmatprep.subr.mxu0 0.0
        %1490 = vmatpush1.msra.mxu0 0.0
        %1491 = vmatprep.subr.mxu0 0.0
        %1492 = vmatpush1.msra.mxu0 0.0
        %1493 = vmatprep.subr.mxu0 0.0
        %1494 = vmatpush1.msra.mxu0 0.0
        %1495 = vmatprep.subr.mxu0 0.0
        %1496 = vmatpush1.msra.mxu0 0.0
        %1497 = vmatprep.subr.mxu0 0.0
        %1498 = vmatpush1.msra.mxu0 0.0
        %1499 = vmatprep.subr.mxu0 0.0
        %1500 = vmatpush1.msra.mxu0 0.0
        %1501 = vmatprep.subr.mxu0 0.0
        %1502 = vmatpush1.msra.mxu0 0.0
        %1503 = vmatprep.subr.mxu0 0.0
        %1504 = vmatpush1.msra.mxu0 0.0
        %1505 = vmatprep.subr.mxu0 0.0
        %1506 = vmatpush1.msra.mxu0 0.0
        %1507 = vmatprep.mubr.f32.mxu0 0.0
        %1508 = vmatmul.mubr.f32.gmra.mrb[0].mxu0 %v926
        %v1509 = vpop.f32.mrb[0].mxu0
        %v1510 = vadd.f32 0.0, %v1509
        %v1511 = vpop.f32.mrb[0].mxu0
        %1512 = vmatprep.mubr.f32.mxu0 0.0
        %1513 = vmatmul.mubr.f32.gmra.mrb[0].mxu0 %v929
        %v1514 = vpop.f32.mrb[0].mxu0
        %v1515 = vadd.f32 0.0, %v1514
        %v1516 = vpop.f32.mrb[0].mxu0
        %1517 = vmatprep.mubr.f32.mxu0 0.0
        %1518 = vmatmul.mubr.f32.gmra.mrb[0].mxu0 %v932
        %v1519 = vpop.f32.mrb[0].mxu0
        %v1520 = vadd.f32 0.0, %v1519
        %v1521 = vpop.f32.mrb[0].mxu0
        %1522 = vmatprep.mubr.f32.mxu0 0.0
        %1523 = vmatmul.mubr.f32.gmra.mrb[0].mxu0 %v935
        %v1524 = vpop.f32.mrb[0].mxu0
        %v1525 = vadd.f32 0.0, %v1524
        %v1526 = vpop.f32.mrb[0].mxu0
        %1527 = vmatprep.mubr.f32.mxu0 0.0
        %1528 = vmatmul.mubr.f32.gmra.mrb[0].mxu0 %v938
        %v1529 = vpop.f32.mrb[0].mxu0
        %v1530 = vadd.f32 0.0, %v1529
        %v1531 = vpop.f32.mrb[0].mxu0
        %1532 = vmatprep.mubr.f32.mxu0 0.0
        %1533 = vmatmul.mubr.f32.gmra.mrb[0].mxu0 %v941
        %v1534 = vpop.f32.mrb[0].mxu0
        %v1535 = vadd.f32 0.0, %v1534
        %v1536 = vpop.f32.mrb[0].mxu0
        %1537 = vmatprep.mubr.f32.mxu0 0.0
        %1538 = vmatmul.mubr.f32.gmra.mrb[0].mxu0 %v944
        %v1539 = vpop.f32.mrb[0].mxu0
        %v1540 = vadd.f32 0.0, %v1539
        %v1541 = vpop.f32.mrb[0].mxu0
        %1542 = vmatprep.mubr.f32.mxu0 0.0
        %1543 = vmatmul.mubr.f32.gmra.mrb[0].mxu0 %v947
        %v1544 = vpop.f32.mrb[0].mxu0
        %v1545 = vadd.f32 0.0, %v1544
        %v1546 = vpop.f32.mrb[0].mxu0
        %1547 = vmatprep.mubr.f32.mxu0 0.0
        %1548 = vmatmul.mubr.f32.gmra.mrb[0].mxu0 %v950
        %v1549 = vpop.f32.mrb[0].mxu0
        %v1550 = vadd.f32 0.0, %v1549
        %v1551 = vpop.f32.mrb[0].mxu0
        %1552 = vmatprep.mubr.f32.mxu0 0.0
        %1553 = vmatmul.mubr.f32.gmra.mrb[0].mxu0 %v953
        %v1554 = vpop.f32.mrb[0].mxu0
        %v1555 = vadd.f32 0.0, %v1554
        %v1556 = vpop.f32.mrb[0].mxu0
        %1557 = vmatprep.mubr.f32.mxu0 0.0
        %1558 = vmatmul.mubr.f32.gmra.mrb[0].mxu0 %v956
        %v1559 = vpop.f32.mrb[0].mxu0
        %v1560 = vadd.f32 0.0, %v1559
        %v1561 = vpop.f32.mrb[0].mxu0
        %1562 = vmatprep.mubr.f32.mxu0 0.0
        %1563 = vmatmul.mubr.f32.gmra.mrb[0].mxu0 %v959
        %v1564 = vpop.f32.mrb[0].mxu0
        %v1565 = vadd.f32 0.0, %v1564
        %v1566 = vpop.f32.mrb[0].mxu0
        %1567 = vmatprep.mubr.f32.mxu0 0.0
        %1568 = vmatmul.mubr.f32.gmra.mrb[0].mxu0 %v962
        %v1569 = vpop.f32.mrb[0].mxu0
        %v1570 = vadd.f32 0.0, %v1569
        %v1571 = vpop.f32.mrb[0].mxu0
        %1572 = vmatprep.mubr.f32.mxu0 0.0
        %1573 = vmatmul.mubr.f32.gmra.mrb[0].mxu0 %v965
        %v1574 = vpop.f32.mrb[0].mxu0
        %v1575 = vadd.f32 0.0, %v1574
        %v1576 = vpop.f32.mrb[0].mxu0
        %1577 = vmatprep.mubr.f32.mxu0 0.0
        %1578 = vmatmul.mubr.f32.gmra.mrb[0].mxu0 %v968
        %v1579 = vpop.f32.mrb[0].mxu0
        %v1580 = vadd.f32 0.0, %v1579
        %v1581 = vpop.f32.mrb[0].mxu0
        %1582 = vmatprep.mubr.f32.mxu0 0.0
        %1583 = vmatmul.mubr.f32.gmra.mrb[0].mxu0 %v971
        %v1584 = vpop.f32.mrb[0].mxu0
        %v1585 = vadd.f32 0.0, %v1584
        %v1586 = vpop.f32.mrb[0].mxu0
        %1587 = vdwg.mxu0
        %v1588 = vld [vmem:[%s415] sm:$0xff]
        %v1589 = vld [vmem:[%s415 + $0x8] sm:$0xff]
        %v1590 = vld [vmem:[%s415 + $0x10] sm:$0xff]
        %v1591 = vld [vmem:[%s415 + $0x18] sm:$0xff]
        %v1592 = vld [vmem:[%s415 + $0x20] sm:$0xff]
        %v1593 = vld [vmem:[%s415 + $0x28] sm:$0xff]
        %v1594 = vld [vmem:[%s415 + $0x30] sm:$0xff]
        %v1595 = vld [vmem:[%s415 + $0x38] sm:$0xff]
        %v1596 = vld [vmem:[%s415 + $0x40] sm:$0xff]
        %v1597 = vld [vmem:[%s415 + $0x48] sm:$0xff]
        %v1598 = vld [vmem:[%s415 + $0x50] sm:$0xff]
        %v1599 = vld [vmem:[%s415 + $0x58] sm:$0xff]
        %v1600 = vld [vmem:[%s415 + $0x60] sm:$0xff]
        %v1601 = vld [vmem:[%s415 + $0x68] sm:$0xff]
        %v1602 = vld [vmem:[%s415 + $0x70] sm:$0xff]
        %v1603 = vld [vmem:[%s415 + $0x78] sm:$0xff]
        %v1604 = vld [vmem:[%s415 + $0x80] sm:$0xff]
        %v1605 = vld [vmem:[%s415 + $0x88] sm:$0xff]
        %v1606 = vld [vmem:[%s415 + $0x90] sm:$0xff]
        %v1607 = vld [vmem:[%s415 + $0x98] sm:$0xff]
        %v1608 = vld [vmem:[%s415 + $0xa0] sm:$0xff]
        %v1609 = vld [vmem:[%s415 + $0xa8] sm:$0xff]
        %v1610 = vld [vmem:[%s415 + $0xb0] sm:$0xff]
        %v1611 = vld [vmem:[%s415 + $0xb8] sm:$0xff]
        %v1612 = vld [vmem:[%s415 + $0xc0] sm:$0xff]
        %v1613 = vld [vmem:[%s415 + $0xc8] sm:$0xff]
        %v1614 = vld [vmem:[%s415 + $0xd0] sm:$0xff]
        %v1615 = vld [vmem:[%s415 + $0xd8] sm:$0xff]
        %v1616 = vld [vmem:[%s415 + $0xe0] sm:$0xff]
        %v1617 = vld [vmem:[%s415 + $0xe8] sm:$0xff]
        %v1618 = vld [vmem:[%s415 + $0xf0] sm:$0xff]
        %v1619 = vld [vmem:[%s415 + $0xf8] sm:$0xff]
        %v1620 = vld [vmem:[%s415 + $0x100] sm:$0xff]
        %v1621 = vld [vmem:[%s415 + $0x108] sm:$0xff]
        %v1622 = vld [vmem:[%s415 + $0x110] sm:$0xff]
        %v1623 = vld [vmem:[%s415 + $0x118] sm:$0xff]
        %v1624 = vld [vmem:[%s415 + $0x120] sm:$0xff]
        %v1625 = vld [vmem:[%s415 + $0x128] sm:$0xff]
        %v1626 = vld [vmem:[%s415 + $0x130] sm:$0xff]
        %v1627 = vld [vmem:[%s415 + $0x138] sm:$0xff]
        %v1628 = vld [vmem:[%s415 + $0x140] sm:$0xff]
        %v1629 = vld [vmem:[%s415 + $0x148] sm:$0xff]
        %v1630 = vld [vmem:[%s415 + $0x150] sm:$0xff]
        %v1631 = vld [vmem:[%s415 + $0x158] sm:$0xff]
        %v1632 = vld [vmem:[%s415 + $0x160] sm:$0xff]
        %v1633 = vld [vmem:[%s415 + $0x168] sm:$0xff]
        %v1634 = vld [vmem:[%s415 + $0x170] sm:$0xff]
        %v1635 = vld [vmem:[%s415 + $0x178] sm:$0xff]
        %v1636 = vmul.f32 %v1588, %v1040
        %v1637 = vmul.f32 %v1589, %v1042
        %v1638 = vmul.f32 %v1590, %v1201
        %v1639 = vmul.f32 %v1591, %v1046
        %v1640 = vmul.f32 %v1592, %v1048
        %v1641 = vmul.f32 %v1593, %v1206
        %v1642 = vmul.f32 %v1594, %v1052
        %v1643 = vmul.f32 %v1595, %v1054
        %v1644 = vmul.f32 %v1596, %v1211
        %v1645 = vmul.f32 %v1597, %v1058
        %v1646 = vmul.f32 %v1598, %v1060
        %v1647 = vmul.f32 %v1599, %v1216
        %v1648 = vmul.f32 %v1600, %v1064
        %v1649 = vmul.f32 %v1601, %v1066
        %v1650 = vmul.f32 %v1602, %v1221
        %v1651 = vmul.f32 %v1603, %v1070
        %v1652 = vmul.f32 %v1604, %v1072
        %v1653 = vmul.f32 %v1605, %v1226
        %v1654 = vmul.f32 %v1606, %v1076
        %v1655 = vmul.f32 %v1607, %v1078
        %v1656 = vmul.f32 %v1608, %v1231
        %v1657 = vmul.f32 %v1609, %v1082
        %v1658 = vmul.f32 %v1610, %v1084
        %v1659 = vmul.f32 %v1611, %v1236
        %v1660 = vmul.f32 %v1612, %v1088
        %v1661 = vmul.f32 %v1613, %v1090
        %v1662 = vmul.f32 %v1614, %v1241
        %v1663 = vmul.f32 %v1615, %v1094
        %v1664 = vmul.f32 %v1616, %v1096
        %v1665 = vmul.f32 %v1617, %v1246
        %v1666 = vmul.f32 %v1618, %v1100
        %v1667 = vmul.f32 %v1619, %v1102
        %v1668 = vmul.f32 %v1620, %v1251
        %v1669 = vmul.f32 %v1621, %v1106
        %v1670 = vmul.f32 %v1622, %v1108
        %v1671 = vmul.f32 %v1623, %v1256
        %v1672 = vmul.f32 %v1624, %v1112
        %v1673 = vmul.f32 %v1625, %v1114
        %v1674 = vmul.f32 %v1626, %v1261
        %v1675 = vmul.f32 %v1627, %v1118
        %v1676 = vmul.f32 %v1628, %v1120
        %v1677 = vmul.f32 %v1629, %v1266
        %v1678 = vmul.f32 %v1630, %v1124
        %v1679 = vmul.f32 %v1631, %v1126
        %v1680 = vmul.f32 %v1632, %v1271
        %v1681 = vmul.f32 %v1633, %v1130
        %v1682 = vmul.f32 %v1634, %v1132
        %v1683 = vmul.f32 %v1635, %v1276
        %v1684 = vlaneseq
        %v1685 = vshrl.u32 %v1684, 7
        %v1686 = vld [vmem:[%s485] sm:$0x1]
        %v1687 = vlaneseq
        %v1688 = vshrl.u32 %v1687, 7
        %v1689 = vsub.s32 0, %v1688
        %v1690 = vrot.slane %v1686, %v1689
        %vm1691 = vcmp.eq.s32.totalorder %v1685, %v1690
        %v1692 = vsel %vm1691, 1, 0
        %v1693 = vcvt.s32.f32 %v1692
        %v1694 = vld [vmem:[#allocation9] sm:$0xff]
        %1695 = vmatprep.subr.mxu0 0.0
        %1696 = vmatpush1.msra.mxu0 %v1636
        %1697 = vmatprep.subr.mxu0 0.0
        %1698 = vmatpush1.msra.mxu0 %v1639
        %1699 = vmatprep.subr.mxu0 0.0
        %1700 = vmatpush1.msra.mxu0 %v1642
        %1701 = vmatprep.subr.mxu0 0.0
        %1702 = vmatpush1.msra.mxu0 %v1645
        %1703 = vmatprep.subr.mxu0 0.0
        %1704 = vmatpush1.msra.mxu0 %v1648
        %1705 = vmatprep.subr.mxu0 0.0
        %1706 = vmatpush1.msra.mxu0 %v1651
        %1707 = vmatprep.subr.mxu0 0.0
        %1708 = vmatpush1.msra.mxu0 %v1654
        %1709 = vmatprep.subr.mxu0 0.0
        %1710 = vmatpush1.msra.mxu0 %v1657
        %1711 = vmatprep.subr.mxu0 0.0
        %1712 = vmatpush1.msra.mxu0 %v1660
        %1713 = vmatprep.subr.mxu0 0.0
        %1714 = vmatpush1.msra.mxu0 %v1663
        %1715 = vmatprep.subr.mxu0 0.0
        %1716 = vmatpush1.msra.mxu0 %v1666
        %1717 = vmatprep.subr.mxu0 0.0
        %1718 = vmatpush1.msra.mxu0 %v1669
        %1719 = vmatprep.subr.mxu0 0.0
        %1720 = vmatpush1.msra.mxu0 %v1672
        %1721 = vmatprep.subr.mxu0 0.0
        %1722 = vmatpush1.msra.mxu0 %v1675
        %1723 = vmatprep.subr.mxu0 0.0
        %1724 = vmatpush1.msra.mxu0 %v1678
        %1725 = vmatprep.subr.mxu0 0.0
        %1726 = vmatpush1.msra.mxu0 %v1681
        %1727 = vmatprep.subr.mxu0 0.0
        %1728 = vmatpush1.msra.mxu0 0.0
        %1729 = vmatprep.subr.mxu0 0.0
        %1730 = vmatpush1.msra.mxu0 0.0
        %1731 = vmatprep.subr.mxu0 0.0
        %1732 = vmatpush1.msra.mxu0 0.0
        %1733 = vmatprep.subr.mxu0 0.0
        %1734 = vmatpush1.msra.mxu0 0.0
        %1735 = vmatprep.subr.mxu0 0.0
        %1736 = vmatpush1.msra.mxu0 0.0
        %1737 = vmatprep.subr.mxu0 0.0
        %1738 = vmatpush1.msra.mxu0 0.0
        %1739 = vmatprep.subr.mxu0 0.0
        %1740 = vmatpush1.msra.mxu0 0.0
        %1741 = vmatprep.subr.mxu0 0.0
        %1742 = vmatpush1.msra.mxu0 0.0
        %1743 = vmatprep.subr.mxu0 0.0
        %1744 = vmatpush1.msra.mxu0 0.0
        %1745 = vmatprep.subr.mxu0 0.0
        %1746 = vmatpush1.msra.mxu0 0.0
        %1747 = vmatprep.subr.mxu0 0.0
        %1748 = vmatpush1.msra.mxu0 0.0
        %1749 = vmatprep.subr.mxu0 0.0
        %1750 = vmatpush1.msra.mxu0 0.0
        %1751 = vmatprep.subr.mxu0 0.0
        %1752 = vmatpush1.msra.mxu0 0.0
        %1753 = vmatprep.subr.mxu0 0.0
        %1754 = vmatpush1.msra.mxu0 0.0
        %1755 = vmatprep.subr.mxu0 0.0
        %1756 = vmatpush1.msra.mxu0 0.0
        %1757 = vmatprep.subr.mxu0 0.0
        %1758 = vmatpush1.msra.mxu0 0.0
        %1759 = vmatprep.mubr.f32.mxu0 0.0
        %1760 = vmatmul.mubr.f32.gmra.mrb[0].mxu0 %v1693
        %v1761 = vpop.f32.mrb[0].mxu0
        %v1762 = vadd.f32 0.0, %v1761
        %v1763 = vpop.f32.mrb[0].mxu0
        %1764 = vdwg.mxu0
        %v1765 = vadd.f32 %v1694, %v1762
        %1766 = vst [vmem:[#allocation9] sm:$0xff] %v1765
        %v1767 = vld [vmem:[%s424] sm:$0xff]
        %v1768 = vld [vmem:[%s424 + $0x8] sm:$0xff]
        %v1769 = vld [vmem:[%s424 + $0x10] sm:$0xff]
        %v1770 = vld [vmem:[%s424 + $0x18] sm:$0xff]
        %v1771 = vld [vmem:[%s424 + $0x20] sm:$0xff]
        %v1772 = vld [vmem:[%s424 + $0x28] sm:$0xff]
        %v1773 = vld [vmem:[%s424 + $0x30] sm:$0xff]
        %v1774 = vld [vmem:[%s424 + $0x38] sm:$0xff]
        %v1775 = vld [vmem:[%s424 + $0x40] sm:$0xff]
        %v1776 = vld [vmem:[%s424 + $0x48] sm:$0xff]
        %v1777 = vld [vmem:[%s424 + $0x50] sm:$0xff]
        %v1778 = vld [vmem:[%s424 + $0x58] sm:$0xff]
        %v1779 = vld [vmem:[%s424 + $0x60] sm:$0xff]
        %v1780 = vld [vmem:[%s424 + $0x68] sm:$0xff]
        %v1781 = vld [vmem:[%s424 + $0x70] sm:$0xff]
        %v1782 = vld [vmem:[%s424 + $0x78] sm:$0xff]
        %v1783 = vld [vmem:[%s424 + $0x80] sm:$0xff]
        %v1784 = vld [vmem:[%s424 + $0x88] sm:$0xff]
        %v1785 = vld [vmem:[%s424 + $0x90] sm:$0xff]
        %v1786 = vld [vmem:[%s424 + $0x98] sm:$0xff]
        %v1787 = vld [vmem:[%s424 + $0xa0] sm:$0xff]
        %v1788 = vld [vmem:[%s424 + $0xa8] sm:$0xff]
        %v1789 = vld [vmem:[%s424 + $0xb0] sm:$0xff]
        %v1790 = vld [vmem:[%s424 + $0xb8] sm:$0xff]
        %v1791 = vld [vmem:[%s424 + $0xc0] sm:$0xff]
        %v1792 = vld [vmem:[%s424 + $0xc8] sm:$0xff]
        %v1793 = vld [vmem:[%s424 + $0xd0] sm:$0xff]
        %v1794 = vld [vmem:[%s424 + $0xd8] sm:$0xff]
        %v1795 = vld [vmem:[%s424 + $0xe0] sm:$0xff]
        %v1796 = vld [vmem:[%s424 + $0xe8] sm:$0xff]
        %v1797 = vld [vmem:[%s424 + $0xf0] sm:$0xff]
        %v1798 = vld [vmem:[%s424 + $0xf8] sm:$0xff]
        %v1799 = vld [vmem:[%s424 + $0x100] sm:$0xff]
        %v1800 = vld [vmem:[%s424 + $0x108] sm:$0xff]
        %v1801 = vld [vmem:[%s424 + $0x110] sm:$0xff]
        %v1802 = vld [vmem:[%s424 + $0x118] sm:$0xff]
        %v1803 = vld [vmem:[%s424 + $0x120] sm:$0xff]
        %v1804 = vld [vmem:[%s424 + $0x128] sm:$0xff]
        %v1805 = vld [vmem:[%s424 + $0x130] sm:$0xff]
        %v1806 = vld [vmem:[%s424 + $0x138] sm:$0xff]
        %v1807 = vld [vmem:[%s424 + $0x140] sm:$0xff]
        %v1808 = vld [vmem:[%s424 + $0x148] sm:$0xff]
        %v1809 = vld [vmem:[%s424 + $0x150] sm:$0xff]
        %v1810 = vld [vmem:[%s424 + $0x158] sm:$0xff]
        %v1811 = vld [vmem:[%s424 + $0x160] sm:$0xff]
        %v1812 = vld [vmem:[%s424 + $0x168] sm:$0xff]
        %v1813 = vld [vmem:[%s424 + $0x170] sm:$0xff]
        %v1814 = vld [vmem:[%s424 + $0x178] sm:$0xff]
        %v1815 = vmul.f32 %v1637, %v1767
        %v1816 = vmul.f32 %v1640, %v1770
        %v1817 = vmul.f32 %v1643, %v1773
        %v1818 = vmul.f32 %v1646, %v1776
        %v1819 = vmul.f32 %v1649, %v1779
        %v1820 = vmul.f32 %v1652, %v1782
        %v1821 = vmul.f32 %v1655, %v1785
        %v1822 = vmul.f32 %v1658, %v1788
        %v1823 = vmul.f32 %v1661, %v1791
        %v1824 = vmul.f32 %v1664, %v1794
        %v1825 = vmul.f32 %v1667, %v1797
        %v1826 = vmul.f32 %v1670, %v1800
        %v1827 = vmul.f32 %v1673, %v1803
        %v1828 = vmul.f32 %v1676, %v1806
        %v1829 = vmul.f32 %v1679, %v1809
        %v1830 = vmul.f32 %v1682, %v1812
        %v1831 = vmul.f32 %v1638, %v1349
        %v1832 = vmul.f32 %v1641, %v1355
        %v1833 = vmul.f32 %v1644, %v1361
        %v1834 = vmul.f32 %v1647, %v1367
        %v1835 = vmul.f32 %v1650, %v1373
        %v1836 = vmul.f32 %v1653, %v1379
        %v1837 = vmul.f32 %v1656, %v1385
        %v1838 = vmul.f32 %v1659, %v1391
        %v1839 = vmul.f32 %v1662, %v1397
        %v1840 = vmul.f32 %v1665, %v1403
        %v1841 = vmul.f32 %v1668, %v1409
        %v1842 = vmul.f32 %v1671, %v1415
        %v1843 = vmul.f32 %v1674, %v1421
        %v1844 = vmul.f32 %v1677, %v1427
        %v1845 = vmul.f32 %v1680, %v1433
        %v1846 = vmul.f32 %v1683, %v1439
        %v1847 = vadd.f32 %v1815, %v1831
        %v1848 = vadd.f32 %v1816, %v1832
        %v1849 = vadd.f32 %v1817, %v1833
        %v1850 = vadd.f32 %v1818, %v1834
        %v1851 = vadd.f32 %v1819, %v1835
        %v1852 = vadd.f32 %v1820, %v1836
        %v1853 = vadd.f32 %v1821, %v1837
        %v1854 = vadd.f32 %v1822, %v1838
        %v1855 = vadd.f32 %v1823, %v1839
        %v1856 = vadd.f32 %v1824, %v1840
        %v1857 = vadd.f32 %v1825, %v1841
        %v1858 = vadd.f32 %v1826, %v1842
        %v1859 = vadd.f32 %v1827, %v1843
        %v1860 = vadd.f32 %v1828, %v1844
        %v1861 = vadd.f32 %v1829, %v1845
        %v1862 = vadd.f32 %v1830, %v1846
        %v1863 = vld [vmem:[#allocation10] sm:$0xff]
        %1864 = vmatprep.subr.mxu0 0.0
        %1865 = vmatpush1.msra.mxu0 %v1847
        %1866 = vmatprep.subr.mxu0 0.0
        %1867 = vmatpush1.msra.mxu0 %v1848
        %1868 = vmatprep.subr.mxu0 0.0
        %1869 = vmatpush1.msra.mxu0 %v1849
        %1870 = vmatprep.subr.mxu0 0.0
        %1871 = vmatpush1.msra.mxu0 %v1850
        %1872 = vmatprep.subr.mxu0 0.0
        %1873 = vmatpush1.msra.mxu0 %v1851
        %1874 = vmatprep.subr.mxu0 0.0
        %1875 = vmatpush1.msra.mxu0 %v1852
        %1876 = vmatprep.subr.mxu0 0.0
        %1877 = vmatpush1.msra.mxu0 %v1853
        %1878 = vmatprep.subr.mxu0 0.0
        %1879 = vmatpush1.msra.mxu0 %v1854
        %1880 = vmatprep.subr.mxu0 0.0
        %1881 = vmatpush1.msra.mxu0 %v1855
        %1882 = vmatprep.subr.mxu0 0.0
        %1883 = vmatpush1.msra.mxu0 %v1856
        %1884 = vmatprep.subr.mxu0 0.0
        %1885 = vmatpush1.msra.mxu0 %v1857
        %1886 = vmatprep.subr.mxu0 0.0
        %1887 = vmatpush1.msra.mxu0 %v1858
        %1888 = vmatprep.subr.mxu0 0.0
        %1889 = vmatpush1.msra.mxu0 %v1859
        %1890 = vmatprep.subr.mxu0 0.0
        %1891 = vmatpush1.msra.mxu0 %v1860
        %1892 = vmatprep.subr.mxu0 0.0
        %1893 = vmatpush1.msra.mxu0 %v1861
        %1894 = vmatprep.subr.mxu0 0.0
        %1895 = vmatpush1.msra.mxu0 %v1862
        %1896 = vmatprep.subr.mxu0 0.0
        %1897 = vmatpush1.msra.mxu0 0.0
        %1898 = vmatprep.subr.mxu0 0.0
        %1899 = vmatpush1.msra.mxu0 0.0
        %1900 = vmatprep.subr.mxu0 0.0
        %1901 = vmatpush1.msra.mxu0 0.0
        %1902 = vmatprep.subr.mxu0 0.0
        %1903 = vmatpush1.msra.mxu0 0.0
        %1904 = vmatprep.subr.mxu0 0.0
        %1905 = vmatpush1.msra.mxu0 0.0
        %1906 = vmatprep.subr.mxu0 0.0
        %1907 = vmatpush1.msra.mxu0 0.0
        %1908 = vmatprep.subr.mxu0 0.0
        %1909 = vmatpush1.msra.mxu0 0.0
        %1910 = vmatprep.subr.mxu0 0.0
        %1911 = vmatpush1.msra.mxu0 0.0
        %1912 = vmatprep.subr.mxu0 0.0
        %1913 = vmatpush1.msra.mxu0 0.0
        %1914 = vmatprep.subr.mxu0 0.0
        %1915 = vmatpush1.msra.mxu0 0.0
        %1916 = vmatprep.subr.mxu0 0.0
        %1917 = vmatpush1.msra.mxu0 0.0
        %1918 = vmatprep.subr.mxu0 0.0
        %1919 = vmatpush1.msra.mxu0 0.0
        %1920 = vmatprep.subr.mxu0 0.0
        %1921 = vmatpush1.msra.mxu0 0.0
        %1922 = vmatprep.subr.mxu0 0.0
        %1923 = vmatpush1.msra.mxu0 0.0
        %1924 = vmatprep.subr.mxu0 0.0
        %1925 = vmatpush1.msra.mxu0 0.0
        %1926 = vmatprep.subr.mxu0 0.0
        %1927 = vmatpush1.msra.mxu0 0.0
        %1928 = vmatprep.mubr.f32.mxu0 0.0
        %1929 = vmatmul.mubr.f32.gmra.mrb[0].mxu0 %v1693
        %v1930 = vpop.f32.mrb[0].mxu0
        %v1931 = vadd.f32 0.0, %v1930
        %v1932 = vpop.f32.mrb[0].mxu0
        %1933 = vdwg.mxu0
        %v1934 = vadd.f32 %v1863, %v1931
        %1935 = vst [vmem:[#allocation10] sm:$0xff] %v1934
        %v1936 = vmul.f32 %v1637, %v1768
        %v1937 = vmul.f32 %v1640, %v1771
        %v1938 = vmul.f32 %v1643, %v1774
        %v1939 = vmul.f32 %v1646, %v1777
        %v1940 = vmul.f32 %v1649, %v1780
        %v1941 = vmul.f32 %v1652, %v1783
        %v1942 = vmul.f32 %v1655, %v1786
        %v1943 = vmul.f32 %v1658, %v1789
        %v1944 = vmul.f32 %v1661, %v1792
        %v1945 = vmul.f32 %v1664, %v1795
        %v1946 = vmul.f32 %v1667, %v1798
        %v1947 = vmul.f32 %v1670, %v1801
        %v1948 = vmul.f32 %v1673, %v1804
        %v1949 = vmul.f32 %v1676, %v1807
        %v1950 = vmul.f32 %v1679, %v1810
        %v1951 = vmul.f32 %v1682, %v1813
        %v1952 = vmul.f32 %v1638, %v1351
        %v1953 = vmul.f32 %v1641, %v1357
        %v1954 = vmul.f32 %v1644, %v1363
        %v1955 = vmul.f32 %v1647, %v1369
        %v1956 = vmul.f32 %v1650, %v1375
        %v1957 = vmul.f32 %v1653, %v1381
        %v1958 = vmul.f32 %v1656, %v1387
        %v1959 = vmul.f32 %v1659, %v1393
        %v1960 = vmul.f32 %v1662, %v1399
        %v1961 = vmul.f32 %v1665, %v1405
        %v1962 = vmul.f32 %v1668, %v1411
        %v1963 = vmul.f32 %v1671, %v1417
        %v1964 = vmul.f32 %v1674, %v1423
        %v1965 = vmul.f32 %v1677, %v1429
        %v1966 = vmul.f32 %v1680, %v1435
        %v1967 = vmul.f32 %v1683, %v1441
        %v1968 = vadd.f32 %v1936, %v1952
        %v1969 = vadd.f32 %v1937, %v1953
        %v1970 = vadd.f32 %v1938, %v1954
        %v1971 = vadd.f32 %v1939, %v1955
        %v1972 = vadd.f32 %v1940, %v1956
        %v1973 = vadd.f32 %v1941, %v1957
        %v1974 = vadd.f32 %v1942, %v1958
        %v1975 = vadd.f32 %v1943, %v1959
        %v1976 = vadd.f32 %v1944, %v1960
        %v1977 = vadd.f32 %v1945, %v1961
        %v1978 = vadd.f32 %v1946, %v1962
        %v1979 = vadd.f32 %v1947, %v1963
        %v1980 = vadd.f32 %v1948, %v1964
        %v1981 = vadd.f32 %v1949, %v1965
        %v1982 = vadd.f32 %v1950, %v1966
        %v1983 = vadd.f32 %v1951, %v1967
        %v1984 = vld [vmem:[#allocation10 + $0x8] sm:$0xff]
        %1985 = vmatprep.subr.mxu0 0.0
        %1986 = vmatpush1.msra.mxu0 %v1968
        %1987 = vmatprep.subr.mxu0 0.0
        %1988 = vmatpush1.msra.mxu0 %v1969
        %1989 = vmatprep.subr.mxu0 0.0
        %1990 = vmatpush1.msra.mxu0 %v1970
        %1991 = vmatprep.subr.mxu0 0.0
        %1992 = vmatpush1.msra.mxu0 %v1971
        %1993 = vmatprep.subr.mxu0 0.0
        %1994 = vmatpush1.msra.mxu0 %v1972
        %1995 = vmatprep.subr.mxu0 0.0
        %1996 = vmatpush1.msra.mxu0 %v1973
        %1997 = vmatprep.subr.mxu0 0.0
        %1998 = vmatpush1.msra.mxu0 %v1974
        %1999 = vmatprep.subr.mxu0 0.0
        %2000 = vmatpush1.msra.mxu0 %v1975
        %2001 = vmatprep.subr.mxu0 0.0
        %2002 = vmatpush1.msra.mxu0 %v1976
        %2003 = vmatprep.subr.mxu0 0.0
        %2004 = vmatpush1.msra.mxu0 %v1977
        %2005 = vmatprep.subr.mxu0 0.0
        %2006 = vmatpush1.msra.mxu0 %v1978
        %2007 = vmatprep.subr.mxu0 0.0
        %2008 = vmatpush1.msra.mxu0 %v1979
        %2009 = vmatprep.subr.mxu0 0.0
        %2010 = vmatpush1.msra.mxu0 %v1980
        %2011 = vmatprep.subr.mxu0 0.0
        %2012 = vmatpush1.msra.mxu0 %v1981
        %2013 = vmatprep.subr.mxu0 0.0
        %2014 = vmatpush1.msra.mxu0 %v1982
        %2015 = vmatprep.subr.mxu0 0.0
        %2016 = vmatpush1.msra.mxu0 %v1983
        %2017 = vmatprep.subr.mxu0 0.0
        %2018 = vmatpush1.msra.mxu0 0.0
        %2019 = vmatprep.subr.mxu0 0.0
        %2020 = vmatpush1.msra.mxu0 0.0
        %2021 = vmatprep.subr.mxu0 0.0
        %2022 = vmatpush1.msra.mxu0 0.0
        %2023 = vmatprep.subr.mxu0 0.0
        %2024 = vmatpush1.msra.mxu0 0.0
        %2025 = vmatprep.subr.mxu0 0.0
        %2026 = vmatpush1.msra.mxu0 0.0
        %2027 = vmatprep.subr.mxu0 0.0
        %2028 = vmatpush1.msra.mxu0 0.0
        %2029 = vmatprep.subr.mxu0 0.0
        %2030 = vmatpush1.msra.mxu0 0.0
        %2031 = vmatprep.subr.mxu0 0.0
        %2032 = vmatpush1.msra.mxu0 0.0
        %2033 = vmatprep.subr.mxu0 0.0
        %2034 = vmatpush1.msra.mxu0 0.0
        %2035 = vmatprep.subr.mxu0 0.0
        %2036 = vmatpush1.msra.mxu0 0.0
        %2037 = vmatprep.subr.mxu0 0.0
        %2038 = vmatpush1.msra.mxu0 0.0
        %2039 = vmatprep.subr.mxu0 0.0
        %2040 = vmatpush1.msra.mxu0 0.0
        %2041 = vmatprep.subr.mxu0 0.0
        %2042 = vmatpush1.msra.mxu0 0.0
        %2043 = vmatprep.subr.mxu0 0.0
        %2044 = vmatpush1.msra.mxu0 0.0
        %2045 = vmatprep.subr.mxu0 0.0
        %2046 = vmatpush1.msra.mxu0 0.0
        %2047 = vmatprep.subr.mxu0 0.0
        %2048 = vmatpush1.msra.mxu0 0.0
        %2049 = vmatprep.mubr.f32.mxu0 0.0
        %2050 = vmatmul.mubr.f32.gmra.mrb[0].mxu0 %v1693
        %v2051 = vpop.f32.mrb[0].mxu0
        %v2052 = vadd.f32 0.0, %v2051
        %v2053 = vpop.f32.mrb[0].mxu0
        %2054 = vdwg.mxu0
        %v2055 = vadd.f32 %v1984, %v2052
        %2056 = vst [vmem:[#allocation10 + $0x8] sm:$0xff] %v2055
        %v2057 = vmul.f32 %v1637, %v1769
        %v2058 = vmul.f32 %v1640, %v1772
        %v2059 = vmul.f32 %v1643, %v1775
        %v2060 = vmul.f32 %v1646, %v1778
        %v2061 = vmul.f32 %v1649, %v1781
        %v2062 = vmul.f32 %v1652, %v1784
        %v2063 = vmul.f32 %v1655, %v1787
        %v2064 = vmul.f32 %v1658, %v1790
        %v2065 = vmul.f32 %v1661, %v1793
        %v2066 = vmul.f32 %v1664, %v1796
        %v2067 = vmul.f32 %v1667, %v1799
        %v2068 = vmul.f32 %v1670, %v1802
        %v2069 = vmul.f32 %v1673, %v1805
        %v2070 = vmul.f32 %v1676, %v1808
        %v2071 = vmul.f32 %v1679, %v1811
        %v2072 = vmul.f32 %v1682, %v1814
        %v2073 = vmul.f32 %v1638, %v1510
        %v2074 = vmul.f32 %v1641, %v1515
        %v2075 = vmul.f32 %v1644, %v1520
        %v2076 = vmul.f32 %v1647, %v1525
        %v2077 = vmul.f32 %v1650, %v1530
        %v2078 = vmul.f32 %v1653, %v1535
        %v2079 = vmul.f32 %v1656, %v1540
        %v2080 = vmul.f32 %v1659, %v1545
        %v2081 = vmul.f32 %v1662, %v1550
        %v2082 = vmul.f32 %v1665, %v1555
        %v2083 = vmul.f32 %v1668, %v1560
        %v2084 = vmul.f32 %v1671, %v1565
        %v2085 = vmul.f32 %v1674, %v1570
        %v2086 = vmul.f32 %v1677, %v1575
        %v2087 = vmul.f32 %v1680, %v1580
        %v2088 = vmul.f32 %v1683, %v1585
        %v2089 = vadd.f32 %v2057, %v2073
        %v2090 = vadd.f32 %v2058, %v2074
        %v2091 = vadd.f32 %v2059, %v2075
        %v2092 = vadd.f32 %v2060, %v2076
        %v2093 = vadd.f32 %v2061, %v2077
        %v2094 = vadd.f32 %v2062, %v2078
        %v2095 = vadd.f32 %v2063, %v2079
        %v2096 = vadd.f32 %v2064, %v2080
        %v2097 = vadd.f32 %v2065, %v2081
        %v2098 = vadd.f32 %v2066, %v2082
        %v2099 = vadd.f32 %v2067, %v2083
        %v2100 = vadd.f32 %v2068, %v2084
        %v2101 = vadd.f32 %v2069, %v2085
        %v2102 = vadd.f32 %v2070, %v2086
        %v2103 = vadd.f32 %v2071, %v2087
        %v2104 = vadd.f32 %v2072, %v2088
        %v2105 = vld [vmem:[#allocation10 + $0x10] sm:$0xff]
        %2106 = vmatprep.subr.mxu0 0.0
        %2107 = vmatpush1.msra.mxu0 %v2089
        %2108 = vmatprep.subr.mxu0 0.0
        %2109 = vmatpush1.msra.mxu0 %v2090
        %2110 = vmatprep.subr.mxu0 0.0
        %2111 = vmatpush1.msra.mxu0 %v2091
        %2112 = vmatprep.subr.mxu0 0.0
        %2113 = vmatpush1.msra.mxu0 %v2092
        %2114 = vmatprep.subr.mxu0 0.0
        %2115 = vmatpush1.msra.mxu0 %v2093
        %2116 = vmatprep.subr.mxu0 0.0
        %2117 = vmatpush1.msra.mxu0 %v2094
        %2118 = vmatprep.subr.mxu0 0.0
        %2119 = vmatpush1.msra.mxu0 %v2095
        %2120 = vmatprep.subr.mxu0 0.0
        %2121 = vmatpush1.msra.mxu0 %v2096
        %2122 = vmatprep.subr.mxu0 0.0
        %2123 = vmatpush1.msra.mxu0 %v2097
        %2124 = vmatprep.subr.mxu0 0.0
        %2125 = vmatpush1.msra.mxu0 %v2098
        %2126 = vmatprep.subr.mxu0 0.0
        %2127 = vmatpush1.msra.mxu0 %v2099
        %2128 = vmatprep.subr.mxu0 0.0
        %2129 = vmatpush1.msra.mxu0 %v2100
        %2130 = vmatprep.subr.mxu0 0.0
        %2131 = vmatpush1.msra.mxu0 %v2101
        %2132 = vmatprep.subr.mxu0 0.0
        %2133 = vmatpush1.msra.mxu0 %v2102
        %2134 = vmatprep.subr.mxu0 0.0
        %2135 = vmatpush1.msra.mxu0 %v2103
        %2136 = vmatprep.subr.mxu0 0.0
        %2137 = vmatpush1.msra.mxu0 %v2104
        %2138 = vmatprep.subr.mxu0 0.0
        %2139 = vmatpush1.msra.mxu0 0.0
        %2140 = vmatprep.subr.mxu0 0.0
        %2141 = vmatpush1.msra.mxu0 0.0
        %2142 = vmatprep.subr.mxu0 0.0
        %2143 = vmatpush1.msra.mxu0 0.0
        %2144 = vmatprep.subr.mxu0 0.0
        %2145 = vmatpush1.msra.mxu0 0.0
        %2146 = vmatprep.subr.mxu0 0.0
        %2147 = vmatpush1.msra.mxu0 0.0
        %2148 = vmatprep.subr.mxu0 0.0
        %2149 = vmatpush1.msra.mxu0 0.0
        %2150 = vmatprep.subr.mxu0 0.0
        %2151 = vmatpush1.msra.mxu0 0.0
        %2152 = vmatprep.subr.mxu0 0.0
        %2153 = vmatpush1.msra.mxu0 0.0
        %2154 = vmatprep.subr.mxu0 0.0
        %2155 = vmatpush1.msra.mxu0 0.0
        %2156 = vmatprep.subr.mxu0 0.0
        %2157 = vmatpush1.msra.mxu0 0.0
        %2158 = vmatprep.subr.mxu0 0.0
        %2159 = vmatpush1.msra.mxu0 0.0
        %2160 = vmatprep.subr.mxu0 0.0
        %2161 = vmatpush1.msra.mxu0 0.0
        %2162 = vmatprep.subr.mxu0 0.0
        %2163 = vmatpush1.msra.mxu0 0.0
        %2164 = vmatprep.subr.mxu0 0.0
        %2165 = vmatpush1.msra.mxu0 0.0
        %2166 = vmatprep.subr.mxu0 0.0
        %2167 = vmatpush1.msra.mxu0 0.0
        %2168 = vmatprep.subr.mxu0 0.0
        %2169 = vmatpush1.msra.mxu0 0.0
        %2170 = vmatprep.mubr.f32.mxu0 0.0
        %2171 = vmatmul.mubr.f32.gmra.mrb[0].mxu0 %v1693
        %v2172 = vpop.f32.mrb[0].mxu0
        %v2173 = vadd.f32 0.0, %v2172
        %v2174 = vpop.f32.mrb[0].mxu0
        %2175 = vdwg.mxu0
        %v2176 = vadd.f32 %v2105, %v2173
        %2177 = vst [vmem:[#allocation10 + $0x10] sm:$0xff] %v2176
        // Predicated region
        $region77: #{tpu_custom_call.1} parent=59 // pred_check
          %p2178 = pneg %p274
        $region78: #{tpu_custom_call.1} parent=59 // pred_check_branch
          %2180 = sbr.rel (%p2178) target = $region80
        $region79: #{tpu_custom_call.1} parent=59 // pred_region
          %s2182 = ssub.s32 128, 128
          %2183 = vsyncadd [#allocation5], %s2182
          %s2185 = sshll.u32 [#allocation9], 4
          %s2186 = int_to_ptr.vmem [resolvable:$true] %s2185
          %2188 = dma.vmem_to_hbm [thread:$0]  %s2186, 128, %s10, [#allocation5]
        $region80: #{tpu_custom_call.1} parent=59 // pred_fallthru
          _
        // Predicated region
        $region81: #{tpu_custom_call.1} parent=59 // pred_check
          %p2189 = pneg %p295
        $region82: #{tpu_custom_call.1} parent=59 // pred_check_branch
          %2191 = sbr.rel (%p2189) target = $region84
        $region83: #{tpu_custom_call.1} parent=59 // pred_region
          %s2193 = ssub.s32 384, 384
          %2194 = vsyncadd [#allocation11], %s2193
          %s2196 = sshll.u32 [#allocation10], 4
          %s2197 = int_to_ptr.vmem [resolvable:$true] %s2196
          %2199 = dma.vmem_to_hbm [thread:$0]  %s2197, 384, %s11, [#allocation11]
        $region84: #{tpu_custom_call.1} parent=59 // pred_fallthru
          _
        // Predicated region
        $region85: #{tpu_custom_call.1} parent=59 // pred_check
          %p2200 = pneg %p274
        $region86: #{tpu_custom_call.1} parent=59 // pred_check_branch
          %2202 = sbr.rel (%p2200) target = $region88
        $region87: #{tpu_custom_call.1} parent=59 // pred_region
          %2203 = dma.done [#allocation5], 128
        $region88: #{tpu_custom_call.1} parent=59 // pred_fallthru
          _
        // Predicated region
        $region89: #{tpu_custom_call.1} parent=59 // pred_check
          %p2204 = pneg %p295
        $region90: #{tpu_custom_call.1} parent=59 // pred_check_branch
          %2206 = sbr.rel (%p2204) target = $region92
        $region91: #{tpu_custom_call.1} parent=59 // pred_region
          %2207 = dma.done [#allocation11], 384
        $region92: #{tpu_custom_call.1} parent=59 // pred_fallthru
          _
      $region60: #{tpu_custom_call.1} parent=5 // pred_fallthru
        _
      %p2208 = scmp.le.s32.totalorder 2, %s26
      // Predicated region
      $region93: #{tpu_custom_call.1} parent=5 // pred_check
        %p2209 = pneg %p2208
      $region94: #{tpu_custom_call.1} parent=5 // pred_check_branch
        %2211 = sbr.rel (%p2209) target = $region96
      $region95: #{tpu_custom_call.1} parent=5 // pred_region
        %s2212 = ssub.s32 %s26, 2
      $region96: #{tpu_custom_call.1} parent=5 // pred_fallthru
        _
    $region6: #{tpu_custom_call.1} parent=1 // loop_footer
      %s30 = sadd.s32 1, %s26
    $region7: #{tpu_custom_call.1} parent=1 // loop_footer_branch
      %25 = sbr.rel target = $region3
    $region8: #{tpu_custom_call.1} parent=1 // loop_exit
      _
    %2213 = vsyncpa [#allocation4], 1
    %s2214 = scalar_lea.sflag [#allocation4], 1
    %2215 = vsyncpa %s2214, 1
    %2216 = vsyncpa [#allocation7], 1
    %s2217 = scalar_lea.sflag [#allocation7], 1
    %2218 = vsyncpa %s2217, 1
    %2219 = vsyncpa [#allocation5], 1
    %s2220 = scalar_lea.sflag [#allocation5], 1
    %2221 = vsyncpa %s2220, 1
    %2222 = vsyncpa [#allocation11], 1

</llo_original>
